<compile_context>
chip_gen: v7x
topology: tpu7x:2x2x1
jax: 0.10.0
libtpu: 0.0.40
codegen_flags: <defaults>
</compile_context>

<pallas_src>
import jax
import jax.numpy as jnp
from jax.experimental import pallas as pl
from jax.experimental.pallas import tpu as pltpu

L = 17      # sequence length implied by Linear(1088 = 64*17, 272)
CIN = 2
C1 = 16
C2 = 64
HID = 272
NUM_CLASSES = 5
EPS = 1e-5


def _round_up(a, b):
    return ((a + b - 1) // b) * b


# --------------------------- Fused kernel ------------------------------------
def archi_kernel(x_ref, w1_ref, sv1_ref, w2_ref, sv2_ref, w3_ref, w4_ref,
                 b4_ref, o_ref):
    w1 = w1_ref[...]
    cdt = w1.dtype                           # MXU input dtype (f32 or bf16)

    # Conv1d(2->16,k=3,p=1) + bias + eval BN(16): one banded GEMM + affine
    h1 = jnp.dot(x_ref[...].astype(cdt), w1, preferred_element_type=jnp.float32)
    h1 = jnp.maximum(h1 * sv1_ref[0:1, :] + sv1_ref[1:2, :], 0.0)
    # TODO(synk): nn.Dropout(p=0.1) is identity in eval mode; not applied.

    # Conv1d(16->64,k=3,p=1) + bias + eval BN(64): one banded GEMM + affine
    h2 = jnp.dot(h1.astype(cdt), w2_ref[...], preferred_element_type=jnp.float32)
    h2 = jnp.maximum(h2 * sv2_ref[0:1, :] + sv2_ref[1:2, :], 0.0)

    # Flatten (columns are already c*L+t = PyTorch order) + Linear(1088,272)
    z = jnp.dot(h2.astype(cdt), w3_ref[...], preferred_element_type=jnp.float32)
    z = jnp.maximum(z + sv1_ref[2:3, :], 0.0)        # + b3, ReLU
    # TODO(synk): nn.Dropout(p=0.2) is identity in eval mode; not applied.

    # Linear(272, num_classes), lane-padded to 128 output columns
    o_ref[...] = (jnp.dot(z.astype(cdt), w4_ref[...],
                          preferred_element_type=jnp.float32) + b4_ref[...])


# --------------------------- Wrapper ------------------------------------------
def _banded_conv_weight(w):
    """w: (Cout, Cin, 3) PyTorch Conv1d weight (stride=1, padding=1).

    Returns B of shape (Cin*L, Cout*L) with
      B[cin*L + s, c*L + t] = w[c, cin, s - t + 1]  if |s - t| <= 1 else 0,
    so that (x flattened as cin*L+s) @ B == conv output flattened as c*L+t.
    """
    s = jnp.arange(L)
    t = jnp.arange(L)
    k = s[:, None] - t[None, :] + 1                     # (Ls, Lt)
    valid = ((k >= 0) & (k <= 2)).astype(w.dtype)
    kc = jnp.clip(k, 0, 2)
    wp = jnp.transpose(w, (1, 0, 2))                    # (Cin, Cout, 3)
    band = wp[:, :, kc] * valid[None, None, :, :]       # (Cin, Cout, Ls, Lt)
    cin, cout = wp.shape[0], wp.shape[1]
    return jnp.transpose(band, (0, 2, 1, 3)).reshape(cin * L, cout * L)


def archi_forward(x, params, *, use_bf16=False, nb_max=512):
    """x: (N, 2, 17) float32, PyTorch NCL layout. Returns (N, num_classes)."""
    N = x.shape[0]
    nc = params['w4'].shape[0]
    f32 = jnp.float32
    x = x.astype(f32)

    NB = _round_up(min(nb_max, max(N, 1)), 8)            # samples per grid block
    Npad = _round_up(N, NB)
    grid = (Npad // NB,)

    # Batch-major, lane-dense input: (Npad, 34) with column idx = cin*L + s.
    xf = jnp.pad(x.reshape(N, CIN * L), ((0, Npad - N), (0, 0)))

    wdt = jnp.bfloat16 if use_bf16 else f32

    # Block-banded conv weights (conv as one GEMM each).
    w1b = _banded_conv_weight(params['w1']).astype(wdt)          # (34, 272)
    w2b = _banded_conv_weight(params['w2']).astype(wdt)          # (272, 1088)

    # Fold eval-mode BatchNorm + conv bias into per-position scale/shift rows.
    s1 = params['bn1_g'] / jnp.sqrt(params['bn1_v'] + EPS)
    t1 = params['bn1_b'] + (params['b1'] - params['bn1_m']) * s1
    s2 = params['bn2_g'] / jnp.sqrt(params['bn2_v'] + EPS)
    t2 = params['bn2_b'] + (params['b2'] - params['bn2_m']) * s2
    sv1 = jnp.stack([jnp.repeat(s1, L), jnp.repeat(t1, L),
                     params['b3']]).astype(f32)                  # (3, 272)
    sv2 = jnp.stack([jnp.repeat(s2, L),
                     jnp.repeat(t2, L)]).astype(f32)             # (2, 1088)

    # Banded conv2 output columns are already c*L+t (= PyTorch Flatten order),
    # so Linear(1088,272) is simply W3^T with no permutation.
    w3t = jnp.transpose(params['w3']).astype(wdt)                # (1088, 272)

    NCp = _round_up(max(nc, 1), 128)                             # lane-dense out
    w4tp = jnp.pad(jnp.transpose(params['w4']),
                   ((0, 0), (0, NCp - nc))).astype(wdt)          # (272, NCp)
    b4p = jnp.pad(params['b4'].reshape(1, nc),
                  ((0, 0), (0, NCp - nc))).astype(f32)           # (1, NCp)

    const2 = lambda i: (0, 0)

    out = pl.pallas_call(
        archi_kernel,
        out_shape=jax.ShapeDtypeStruct((Npad, NCp), f32),
        grid=grid,
        in_specs=[
            pl.BlockSpec((NB, CIN * L), lambda i: (i, 0)),   # activations
            pl.BlockSpec((CIN * L, C1 * L), const2),         # banded conv1 (resident)
            pl.BlockSpec((3, C1 * L), const2),               # BN1 scale/shift + b3
            pl.BlockSpec((C1 * L, C2 * L), const2),          # banded conv2 (resident)
            pl.BlockSpec((2, C2 * L), const2),               # BN2 scale/shift
            pl.BlockSpec((C2 * L, HID), const2),             # Linear1 W^T (resident)
            pl.BlockSpec((HID, NCp), const2),                # Linear2 W^T (padded)
            pl.BlockSpec((1, NCp), const2),                  # Linear2 bias (padded)
        ],
        out_specs=pl.BlockSpec((NB, NCp), lambda i: (i, 0)),
        compiler_params=pltpu.CompilerParams(
            dimension_semantics=("parallel",),
            vmem_limit_bytes=32 * 1024 * 1024,
        ),
    )(xf, w1b, sv1, w2b, sv2, w3t, w4tp, b4p)
    return out[:N, :nc]


# --------------------------- Pure-JAX reference (for validation) -------------
def archi_reference(x, params):
    def bn(h, g, b, m, v):
        return (h - m[None, :, None]) / jnp.sqrt(v[None, :, None] + EPS) \
            * g[None, :, None] + b[None, :, None]

    N = x.shape[0]
    xp = jnp.pad(x, ((0, 0), (0, 0), (1, 1)))
    cols = jnp.stack([xp[:, :, k:k + L] for k in range(3)], axis=-1)   # (N,CIN,L,3)
    h = jnp.einsum('nclk,ock->nol', cols, params['w1']) + params['b1'][None, :, None]
    h = jnp.maximum(bn(h, params['bn1_g'], params['bn1_b'],
                       params['bn1_m'], params['bn1_v']), 0.0)
    hp = jnp.pad(h, ((0, 0), (0, 0), (1, 1)))
    cols2 = jnp.stack([hp[:, :, k:k + L] for k in range(3)], axis=-1)  # (N,C1,L,3)
    h2 = jnp.einsum('nclk,ock->nol', cols2, params['w2']) + params['b2'][None, :, None]
    h2 = jnp.maximum(bn(h2, params['bn2_g'], params['bn2_b'],
                        params['bn2_m'], params['bn2_v']), 0.0)
    flat = h2.reshape(N, C2 * L)                                       # idx = c*L + t
    z = jnp.maximum(flat @ params['w3'].T + params['b3'], 0.0)
    return z @ params['w4'].T + params['b4']


def make_params(key, num_classes=NUM_CLASSES):
    ks = jax.random.split(key, 16)
    f32 = jnp.float32
    return dict(
        w1=0.1 * jax.random.normal(ks[0], (C1, CIN, 3), f32),
        b1=0.1 * jax.random.normal(ks[1], (C1,), f32),
        bn1_g=1.0 + 0.1 * jax.random.normal(ks[2], (C1,), f32),
        bn1_b=0.1 * jax.random.normal(ks[3], (C1,), f32),
        bn1_m=0.1 * jax.random.normal(ks[4], (C1,), f32),
        bn1_v=0.5 + jax.random.uniform(ks[5], (C1,), f32),
        w2=0.1 * jax.random.normal(ks[6], (C2, C1, 3), f32),
        b2=0.1 * jax.random.normal(ks[7], (C2,), f32),
        bn2_g=1.0 + 0.1 * jax.random.normal(ks[8], (C2,), f32),
        bn2_b=0.1 * jax.random.normal(ks[9], (C2,), f32),
        bn2_m=0.1 * jax.random.normal(ks[10], (C2,), f32),
        bn2_v=0.5 + jax.random.uniform(ks[11], (C2,), f32),
        w3=0.05 * jax.random.normal(ks[12], (HID, C2 * L), f32),
        b3=0.05 * jax.random.normal(ks[13], (HID,), f32),
        w4=0.05 * jax.random.normal(ks[14], (num_classes, HID), f32),
        b4=0.05 * jax.random.normal(ks[15], (num_classes,), f32),
    )


if __name__ == "__main__":
    key = jax.random.PRNGKey(0)
    k_param, k_x, k_x2 = jax.random.split(key, 3)
    params = make_params(k_param, NUM_CLASSES)

    # Small single-block batch, exact f32 path.
    x = jax.random.normal(k_x, (4, CIN, L), jnp.float32)     # (N=4, 2, 17), NCL
    y = jax.block_until_ready(archi_forward(x, params))
    assert y.shape == (4, NUM_CLASSES)
    y_ref = jax.block_until_ready(archi_reference(x, params))
    assert jnp.allclose(y, y_ref, rtol=2e-3, atol=2e-3), \
        f"max abs err {jnp.max(jnp.abs(y - y_ref))}"

    # Multi-block grid + batch padding path (grid = 3 blocks of 16).
    x2 = jax.random.normal(k_x2, (37, CIN, L), jnp.float32)
    y2 = jax.block_until_ready(archi_forward(x2, params, nb_max=16))
    y2_ref = jax.block_until_ready(archi_reference(x2, params))
    assert jnp.allclose(y2, y2_ref, rtol=2e-3, atol=2e-3), \
        f"max abs err {jnp.max(jnp.abs(y2 - y2_ref))}"

    # bf16 MXU inputs (v6e/v7x fast path), f32 accumulation, loose tolerance.
    yb = jax.block_until_ready(archi_forward(x2, params, use_bf16=True,
                                             nb_max=64))
    assert jnp.allclose(yb, y2_ref, rtol=5e-2, atol=5e-2), \
        f"bf16 max abs err {jnp.max(jnp.abs(yb - y2_ref))}"

    print("KERNEL_OK")
</pallas_src>

<mosaic_0001>
module attributes {stable_mosaic.version = 11 : i64} {
  func.func @archi_kernel(%arg0: i32, %arg1: memref<8x34xf32, #tpu.memory_space<vmem>>, %arg2: memref<34x272xf32, #tpu.memory_space<vmem>>, %arg3: memref<3x272xf32, #tpu.memory_space<vmem>>, %arg4: memref<272x1088xf32, #tpu.memory_space<vmem>>, %arg5: memref<2x1088xf32, #tpu.memory_space<vmem>>, %arg6: memref<1088x272xf32, #tpu.memory_space<vmem>>, %arg7: memref<272x128xf32, #tpu.memory_space<vmem>>, %arg8: memref<1x128xf32, #tpu.memory_space<vmem>>, %arg9: memref<8x128xf32, #tpu.memory_space<vmem>>) attributes {dimension_semantics = [#tpu.dimension_semantics<parallel>], iteration_bounds = array<i64: 1>, scalar_prefetch = 0 : i64, scratch_operands = 0 : i64, tpu.core_type = #tpu.core_type<tc>, window_params = [{transform_indices = @transform_0, window_bounds = array<i64: 8, 34>}, {pipeline_mode = #tpu.pipeline_mode<synchronous>, transform_indices = @transform_1, window_bounds = array<i64: 34, 272>}, {pipeline_mode = #tpu.pipeline_mode<synchronous>, transform_indices = @transform_2, window_bounds = array<i64: 3, 272>}, {pipeline_mode = #tpu.pipeline_mode<synchronous>, transform_indices = @transform_3, window_bounds = array<i64: 272, 1088>}, {pipeline_mode = #tpu.pipeline_mode<synchronous>, transform_indices = @transform_4, window_bounds = array<i64: 2, 1088>}, {pipeline_mode = #tpu.pipeline_mode<synchronous>, transform_indices = @transform_5, window_bounds = array<i64: 1088, 272>}, {pipeline_mode = #tpu.pipeline_mode<synchronous>, transform_indices = @transform_6, window_bounds = array<i64: 272, 128>}, {pipeline_mode = #tpu.pipeline_mode<synchronous>, transform_indices = @transform_7, window_bounds = array<i64: 1, 128>}, {transform_indices = @transform_8, window_bounds = array<i64: 8, 128>}]} {
    %c0 = arith.constant 0 : index
    %c0_0 = arith.constant 0 : index
    %0 = vector.load %arg2[%c0, %c0_0] : memref<34x272xf32, #tpu.memory_space<vmem>>, vector<34x272xf32>
    %c0_1 = arith.constant 0 : index
    %c0_2 = arith.constant 0 : index
    %1 = vector.load %arg1[%c0_1, %c0_2] : memref<8x34xf32, #tpu.memory_space<vmem>>, vector<8x34xf32>
    %cst = arith.constant dense<0.000000e+00> : vector<8x272xf32>
    %2 = tpu.matmul %1, %0, %cst {dimension_numbers = #tpu.dot_dimension_numbers<[1], [0], [0], [1], [0, 0, 1, 1], [], []>} : vector<8x34xf32>, vector<34x272xf32>, vector<8x272xf32> -> vector<8x272xf32>
    %c0_3 = arith.constant 0 : index
    %c0_4 = arith.constant 0 : index
    %3 = vector.load %arg3[%c0_3, %c0_4] : memref<3x272xf32, #tpu.memory_space<vmem>>, vector<1x272xf32>
    %4 = vector.broadcast %3 : vector<1x272xf32> to vector<8x272xf32>
    %5 = arith.mulf %2, %4 : vector<8x272xf32>
    %c1 = arith.constant 1 : index
    %c0_5 = arith.constant 0 : index
    %6 = vector.load %arg3[%c1, %c0_5] : memref<3x272xf32, #tpu.memory_space<vmem>>, vector<1x272xf32>
    %7 = vector.broadcast %6 : vector<1x272xf32> to vector<8x272xf32>
    %8 = arith.addf %5, %7 : vector<8x272xf32>
    %cst_6 = arith.constant 0.000000e+00 : f32
    %9 = vector.broadcast %cst_6 : f32 to vector<8x272xf32>
    %10 = arith.maximumf %8, %9 : vector<8x272xf32>
    %c0_7 = arith.constant 0 : index
    %c0_8 = arith.constant 0 : index
    %11 = vector.load %arg4[%c0_7, %c0_8] : memref<272x1088xf32, #tpu.memory_space<vmem>>, vector<272x1088xf32>
    %cst_9 = arith.constant dense<0.000000e+00> : vector<8x1088xf32>
    %12 = tpu.matmul %10, %11, %cst_9 {dimension_numbers = #tpu.dot_dimension_numbers<[1], [0], [0], [1], [0, 0, 1, 1], [], []>} : vector<8x272xf32>, vector<272x1088xf32>, vector<8x1088xf32> -> vector<8x1088xf32>
    %c0_10 = arith.constant 0 : index
    %c0_11 = arith.constant 0 : index
    %13 = vector.load %arg5[%c0_10, %c0_11] : memref<2x1088xf32, #tpu.memory_space<vmem>>, vector<1x1088xf32>
    %14 = vector.broadcast %13 : vector<1x1088xf32> to vector<8x1088xf32>
    %15 = arith.mulf %12, %14 : vector<8x1088xf32>
    %c1_12 = arith.constant 1 : index
    %c0_13 = arith.constant 0 : index
    %16 = vector.load %arg5[%c1_12, %c0_13] : memref<2x1088xf32, #tpu.memory_space<vmem>>, vector<1x1088xf32>
    %17 = vector.broadcast %16 : vector<1x1088xf32> to vector<8x1088xf32>
    %18 = arith.addf %15, %17 : vector<8x1088xf32>
    %cst_14 = arith.constant 0.000000e+00 : f32
    %19 = vector.broadcast %cst_14 : f32 to vector<8x1088xf32>
    %20 = arith.maximumf %18, %19 : vector<8x1088xf32>
    %c0_15 = arith.constant 0 : index
    %c0_16 = arith.constant 0 : index
    %21 = vector.load %arg6[%c0_15, %c0_16] : memref<1088x272xf32, #tpu.memory_space<vmem>>, vector<1088x272xf32>
    %cst_17 = arith.constant dense<0.000000e+00> : vector<8x272xf32>
    %22 = tpu.matmul %20, %21, %cst_17 {dimension_numbers = #tpu.dot_dimension_numbers<[1], [0], [0], [1], [0, 0, 1, 1], [], []>} : vector<8x1088xf32>, vector<1088x272xf32>, vector<8x272xf32> -> vector<8x272xf32>
    %c2 = arith.constant 2 : index
    %c0_18 = arith.constant 0 : index
    %23 = vector.load %arg3[%c2, %c0_18] : memref<3x272xf32, #tpu.memory_space<vmem>>, vector<1x272xf32>
    %24 = vector.broadcast %23 : vector<1x272xf32> to vector<8x272xf32>
    %25 = arith.addf %22, %24 : vector<8x272xf32>
    %cst_19 = arith.constant 0.000000e+00 : f32
    %26 = vector.broadcast %cst_19 : f32 to vector<8x272xf32>
    %27 = arith.maximumf %25, %26 : vector<8x272xf32>
    %c0_20 = arith.constant 0 : index
    %c0_21 = arith.constant 0 : index
    %28 = vector.load %arg7[%c0_20, %c0_21] : memref<272x128xf32, #tpu.memory_space<vmem>>, vector<272x128xf32>
    %cst_22 = arith.constant dense<0.000000e+00> : vector<8x128xf32>
    %29 = tpu.matmul %27, %28, %cst_22 {dimension_numbers = #tpu.dot_dimension_numbers<[1], [0], [0], [1], [0, 0, 1, 1], [], []>} : vector<8x272xf32>, vector<272x128xf32>, vector<8x128xf32> -> vector<8x128xf32>
    %c0_23 = arith.constant 0 : index
    %c0_24 = arith.constant 0 : index
    %30 = vector.load %arg8[%c0_23, %c0_24] : memref<1x128xf32, #tpu.memory_space<vmem>>, vector<1x128xf32>
    %31 = vector.broadcast %30 : vector<1x128xf32> to vector<8x128xf32>
    %32 = arith.addf %29, %31 : vector<8x128xf32>
    %c0_25 = arith.constant 0 : index
    %c0_26 = arith.constant 0 : index
    %33 = vector.load %arg9[%c0_25, %c0_26] : memref<8x128xf32, #tpu.memory_space<vmem>>, vector<8x128xf32>
    tpu.vector_store %arg9[%c0_25, %c0_26], %32 {strides = array<i32>} : memref<8x128xf32, #tpu.memory_space<vmem>>, vector<8x128xf32>,
    return
  }
  func.func @transform_0(%arg0: i32) -> (i32, i32) {
    %c0_i32 = arith.constant 0 : i32
    %c0_i32_0 = arith.constant 0 : i32
    return %arg0, %c0_i32 : i32, i32
  }
  func.func @transform_1(%arg0: i32) -> (i32, i32) {
    %c0_i32 = arith.constant 0 : i32
    %c0_i32_0 = arith.constant 0 : i32
    %c0_i32_1 = arith.constant 0 : i32
    return %c0_i32, %c0_i32_0 : i32, i32
  }
  func.func @transform_2(%arg0: i32) -> (i32, i32) {
    %c0_i32 = arith.constant 0 : i32
    %c0_i32_0 = arith.constant 0 : i32
    %c0_i32_1 = arith.constant 0 : i32
    return %c0_i32, %c0_i32_0 : i32, i32
  }
  func.func @transform_3(%arg0: i32) -> (i32, i32) {
    %c0_i32 = arith.constant 0 : i32
    %c0_i32_0 = arith.constant 0 : i32
    %c0_i32_1 = arith.constant 0 : i32
    return %c0_i32, %c0_i32_0 : i32, i32
  }
  func.func @transform_4(%arg0: i32) -> (i32, i32) {
    %c0_i32 = arith.constant 0 : i32
    %c0_i32_0 = arith.constant 0 : i32
    %c0_i32_1 = arith.constant 0 : i32
    return %c0_i32, %c0_i32_0 : i32, i32
  }
  func.func @transform_5(%arg0: i32) -> (i32, i32) {
    %c0_i32 = arith.constant 0 : i32
    %c0_i32_0 = arith.constant 0 : i32
    %c0_i32_1 = arith.constant 0 : i32
    return %c0_i32, %c0_i32_0 : i32, i32
  }
  func.func @transform_6(%arg0: i32) -> (i32, i32) {
    %c0_i32 = arith.constant 0 : i32
    %c0_i32_0 = arith.constant 0 : i32
    %c0_i32_1 = arith.constant 0 : i32
    return %c0_i32, %c0_i32_0 : i32, i32
  }
  func.func @transform_7(%arg0: i32) -> (i32, i32) {
    %c0_i32 = arith.constant 0 : i32
    %c0_i32_0 = arith.constant 0 : i32
    %c0_i32_1 = arith.constant 0 : i32
    return %c0_i32, %c0_i32_0 : i32, i32
  }
  func.func @transform_8(%arg0: i32) -> (i32, i32) {
    %c0_i32 = arith.constant 0 : i32
    %c0_i32_0 = arith.constant 0 : i32
    return %arg0, %c0_i32 : i32, i32
  }
}

</mosaic_0001>

<llo_original>
// kernel: tpu_custom_call.1
$region0: #{tpu_custom_call.1}
  #allocation0 [shape = 'u32[]', space=smem, size = 0x4, offset = 0x4, fixed_abs, tag = 'smem constant byte address 0x4 - core index']
  #allocation1 [shape = 'u32[144,128]{1,0:T(1,128)}', space=vmem, size = 0x12000, scoped, tag = 'internal scratch']
  %s0 = inlined_call_operand.vmem [shape: f32[8,34], index: 0, kind: input, shape index: {}]
  %s1 = inlined_call_operand.vmem [shape: f32[34,272], index: 1, kind: input, shape index: {}]
  %s2 = inlined_call_operand.vmem [shape: f32[3,272], index: 2, kind: input, shape index: {}]
  %s3 = inlined_call_operand.vmem [shape: f32[272,1088], index: 3, kind: input, shape index: {}]
  %s4 = inlined_call_operand.vmem [shape: f32[2,1088], index: 4, kind: input, shape index: {}]
  %s5 = inlined_call_operand.vmem [shape: f32[1088,272], index: 5, kind: input, shape index: {}]
  %s6 = inlined_call_operand.vmem [shape: f32[272,128], index: 6, kind: input, shape index: {}]
  %s7 = inlined_call_operand.vmem [shape: f32[1,128], index: 7, kind: input, shape index: {}]
  %s8 = inlined_call_operand.hbm [shape: f32[8,128], index: 8, kind: output, shape index: {}]
  %s9 = sld [smem:[#allocation0]]
  $region42: #{tpu_custom_call.1} parent=0
    _
  %s11 = ssub.s32 1, %s9
  %s12 = scalar_select 0, %s11, %s9
  $region1: #{tpu_custom_call.1} parent=0
    #allocation2 [shape = 'u8[4096]{0}', space=vmem, size = 0x1000, scoped, tag = 'output window, operand 0, single buffered']
    #allocation3 [shape = 's32[1]{0}', space=sflag, size = 0x4, scoped, tag = 'scoped memory for tpu_custom_call.1']
    %13 = vsyncpa [#allocation3], 0
    // Predicated region
    $region2: #{tpu_custom_call.1} parent=1 // pred_check
      _
    $region3: #{tpu_custom_call.1} parent=1 // pred_check_branch
      %15 = sbr.rel (0) target = $region5
    $region4: #{tpu_custom_call.1} parent=1 // pred_region
      _
    $region5: #{tpu_custom_call.1} parent=1 // pred_fallthru
      _
    // Predicated region
    $region6: #{tpu_custom_call.1} parent=1 // pred_check
      _
    $region7: #{tpu_custom_call.1} parent=1 // pred_check_branch
      %17 = sbr.rel (0) target = $region9
    $region8: #{tpu_custom_call.1} parent=1 // pred_region
      _
    $region9: #{tpu_custom_call.1} parent=1 // pred_fallthru
      _
    // Predicated region
    $region10: #{tpu_custom_call.1} parent=1 // pred_check
      _
    $region11: #{tpu_custom_call.1} parent=1 // pred_check_branch
      %19 = sbr.rel (0) target = $region13
    $region12: #{tpu_custom_call.1} parent=1 // pred_region
      _
    $region13: #{tpu_custom_call.1} parent=1 // pred_fallthru
      _
    // Predicated region
    $region14: #{tpu_custom_call.1} parent=1 // pred_check
      _
    $region15: #{tpu_custom_call.1} parent=1 // pred_check_branch
      %21 = sbr.rel (0) target = $region17
    $region16: #{tpu_custom_call.1} parent=1 // pred_region
      _
    $region17: #{tpu_custom_call.1} parent=1 // pred_fallthru
      _
    // Predicated region
    $region18: #{tpu_custom_call.1} parent=1 // pred_check
      _
    $region19: #{tpu_custom_call.1} parent=1 // pred_check_branch
      %23 = sbr.rel (0) target = $region21
    $region20: #{tpu_custom_call.1} parent=1 // pred_region
      _
    $region21: #{tpu_custom_call.1} parent=1 // pred_fallthru
      _
    // Predicated region
    $region22: #{tpu_custom_call.1} parent=1 // pred_check
      _
    $region23: #{tpu_custom_call.1} parent=1 // pred_check_branch
      %25 = sbr.rel (0) target = $region25
    $region24: #{tpu_custom_call.1} parent=1 // pred_region
      _
    $region25: #{tpu_custom_call.1} parent=1 // pred_fallthru
      _
    // Predicated region
    $region26: #{tpu_custom_call.1} parent=1 // pred_check
      _
    $region27: #{tpu_custom_call.1} parent=1 // pred_check_branch
      %27 = sbr.rel (0) target = $region29
    $region28: #{tpu_custom_call.1} parent=1 // pred_region
      _
    $region29: #{tpu_custom_call.1} parent=1 // pred_fallthru
      _
    // Predicated region
    $region30: #{tpu_custom_call.1} parent=1 // pred_check
      _
    $region31: #{tpu_custom_call.1} parent=1 // pred_check_branch
      %29 = sbr.rel (0) target = $region33
    $region32: #{tpu_custom_call.1} parent=1 // pred_region
      _
    $region33: #{tpu_custom_call.1} parent=1 // pred_fallthru
      _
    %v30 = vld [vmem:[%s1] sm:$0xff]
    %v31 = vld [vmem:[%s1 + $0x8] sm:$0xff]
    %v32 = vld [vmem:[%s1 + $0x10] sm:$0xff]
    %v33 = vld [vmem:[%s1 + $0x18] sm:$0xff]
    %v34 = vld [vmem:[%s1 + $0x20] sm:$0xff]
    %v35 = vld [vmem:[%s1 + $0x28] sm:$0xff]
    %v36 = vld [vmem:[%s1 + $0x30] sm:$0xff]
    %v37 = vld [vmem:[%s1 + $0x38] sm:$0xff]
    %v38 = vld [vmem:[%s1 + $0x40] sm:$0xff]
    %v39 = vld [vmem:[%s1 + $0x48] sm:$0xff]
    %v40 = vld [vmem:[%s1 + $0x50] sm:$0xff]
    %v41 = vld [vmem:[%s1 + $0x58] sm:$0xff]
    %v42 = vld [vmem:[%s1 + $0x60] sm:$0x3]
    %v43 = vld [vmem:[%s1 + $0x68] sm:$0x3]
    %v44 = vld [vmem:[%s1 + $0x70] sm:$0x3]
    %v45 = vld [vmem:[%s0] sm:$0xff]
    %vm46 = vcmask 277504
    %v48 = vsel %vm46, %v45, 0
    %vm50 = vcmask 1041408
    %v52 = vsel %vm50, %v42, 0
    %v55 = vsel %vm50, %v43, 0
    %v58 = vsel %vm50, %v44, 0
    %60 = vmatprep.subr.mxu0 %v31
    %61 = vmatpush1.msra.mxu0 %v30
    %62 = vmatprep.subr.mxu0 %v34
    %63 = vmatpush1.msra.mxu0 %v33
    %64 = vmatprep.subr.mxu0 %v37
    %65 = vmatpush1.msra.mxu0 %v36
    %66 = vmatprep.subr.mxu0 %v40
    %67 = vmatpush1.msra.mxu0 %v39
    %68 = vmatprep.subr.mxu0 %v55
    %69 = vmatpush1.msra.mxu0 %v52
    %70 = vmatprep.subr.mxu0 0.0
    %71 = vmatpush1.msra.mxu0 0.0
    %72 = vmatprep.subr.mxu0 0.0
    %73 = vmatpush1.msra.mxu0 0.0
    %74 = vmatprep.subr.mxu0 0.0
    %75 = vmatpush1.msra.mxu0 0.0
    %76 = vmatprep.subr.mxu0 0.0
    %77 = vmatpush1.msra.mxu0 0.0
    %78 = vmatprep.subr.mxu0 0.0
    %79 = vmatpush1.msra.mxu0 0.0
    %80 = vmatprep.subr.mxu0 0.0
    %81 = vmatpush1.msra.mxu0 0.0
    %82 = vmatprep.subr.mxu0 0.0
    %83 = vmatpush1.msra.mxu0 0.0
    %84 = vmatprep.subr.mxu0 0.0
    %85 = vmatpush1.msra.mxu0 0.0
    %86 = vmatprep.subr.mxu0 0.0
    %87 = vmatpush1.msra.mxu0 0.0
    %88 = vmatprep.subr.mxu0 0.0
    %89 = vmatpush1.msra.mxu0 0.0
    %90 = vmatprep.subr.mxu0 0.0
    %91 = vmatpush1.msra.mxu0 0.0
    %92 = vmatprep.subr.mxu0 0.0
    %93 = vmatpush1.msra.mxu0 0.0
    %94 = vmatprep.subr.mxu0 0.0
    %95 = vmatpush1.msra.mxu0 0.0
    %96 = vmatprep.subr.mxu0 0.0
    %97 = vmatpush1.msra.mxu0 0.0
    %98 = vmatprep.subr.mxu0 0.0
    %99 = vmatpush1.msra.mxu0 0.0
    %100 = vmatprep.subr.mxu0 0.0
    %101 = vmatpush1.msra.mxu0 0.0
    %102 = vmatprep.subr.mxu0 0.0
    %103 = vmatpush1.msra.mxu0 0.0
    %104 = vmatprep.subr.mxu0 0.0
    %105 = vmatpush1.msra.mxu0 0.0
    %106 = vmatprep.subr.mxu0 0.0
    %107 = vmatpush1.msra.mxu0 0.0
    %108 = vmatprep.subr.mxu0 0.0
    %109 = vmatpush1.msra.mxu0 0.0
    %110 = vmatprep.subr.mxu0 0.0
    %111 = vmatpush1.msra.mxu0 0.0
    %112 = vmatprep.subr.mxu0 0.0
    %113 = vmatpush1.msra.mxu0 0.0
    %114 = vmatprep.subr.mxu0 0.0
    %115 = vmatpush1.msra.mxu0 0.0
    %116 = vmatprep.subr.mxu0 0.0
    %117 = vmatpush1.msra.mxu0 0.0
    %118 = vmatprep.subr.mxu0 0.0
    %119 = vmatpush1.msra.mxu0 0.0
    %120 = vmatprep.subr.mxu0 0.0
    %121 = vmatpush1.msra.mxu0 0.0
    %122 = vmatprep.subr.mxu0 0.0
    %123 = vmatpush1.msra.mxu0 0.0
    %124 = vmatprep.mubr.f32.mxu0 0.0
    %125 = vmatmul.mubr.f32.gmra.mrb[0].mxu0 %v48
    %v126 = vpop.f32.mrb[0].mxu0
    %v127 = vadd.f32 0.0, %v126
    %v128 = vpop.f32.mrb[0].mxu0
    %v129 = vadd.f32 0.0, %v128
    %130 = vdwg.mxu0
    %131 = vmatprep.subr.mxu0 0.0
    %132 = vmatpush1.msra.mxu0 %v32
    %133 = vmatprep.subr.mxu0 0.0
    %134 = vmatpush1.msra.mxu0 %v35
    %135 = vmatprep.subr.mxu0 0.0
    %136 = vmatpush1.msra.mxu0 %v38
    %137 = vmatprep.subr.mxu0 0.0
    %138 = vmatpush1.msra.mxu0 %v41
    %139 = vmatprep.subr.mxu0 0.0
    %140 = vmatpush1.msra.mxu0 %v58
    %141 = vmatprep.subr.mxu0 0.0
    %142 = vmatpush1.msra.mxu0 0.0
    %143 = vmatprep.subr.mxu0 0.0
    %144 = vmatpush1.msra.mxu0 0.0
    %145 = vmatprep.subr.mxu0 0.0
    %146 = vmatpush1.msra.mxu0 0.0
    %147 = vmatprep.subr.mxu0 0.0
    %148 = vmatpush1.msra.mxu0 0.0
    %149 = vmatprep.subr.mxu0 0.0
    %150 = vmatpush1.msra.mxu0 0.0
    %151 = vmatprep.subr.mxu0 0.0
    %152 = vmatpush1.msra.mxu0 0.0
    %153 = vmatprep.subr.mxu0 0.0
    %154 = vmatpush1.msra.mxu0 0.0
    %155 = vmatprep.subr.mxu0 0.0
    %156 = vmatpush1.msra.mxu0 0.0
    %157 = vmatprep.subr.mxu0 0.0
    %158 = vmatpush1.msra.mxu0 0.0
    %159 = vmatprep.subr.mxu0 0.0
    %160 = vmatpush1.msra.mxu0 0.0
    %161 = vmatprep.subr.mxu0 0.0
    %162 = vmatpush1.msra.mxu0 0.0
    %163 = vmatprep.subr.mxu0 0.0
    %164 = vmatpush1.msra.mxu0 0.0
    %165 = vmatprep.subr.mxu0 0.0
    %166 = vmatpush1.msra.mxu0 0.0
    %167 = vmatprep.subr.mxu0 0.0
    %168 = vmatpush1.msra.mxu0 0.0
    %169 = vmatprep.subr.mxu0 0.0
    %170 = vmatpush1.msra.mxu0 0.0
    %171 = vmatprep.subr.mxu0 0.0
    %172 = vmatpush1.msra.mxu0 0.0
    %173 = vmatprep.subr.mxu0 0.0
    %174 = vmatpush1.msra.mxu0 0.0
    %175 = vmatprep.subr.mxu0 0.0
    %176 = vmatpush1.msra.mxu0 0.0
    %177 = vmatprep.subr.mxu0 0.0
    %178 = vmatpush1.msra.mxu0 0.0
    %179 = vmatprep.subr.mxu0 0.0
    %180 = vmatpush1.msra.mxu0 0.0
    %181 = vmatprep.subr.mxu0 0.0
    %182 = vmatpush1.msra.mxu0 0.0
    %183 = vmatprep.subr.mxu0 0.0
    %184 = vmatpush1.msra.mxu0 0.0
    %185 = vmatprep.subr.mxu0 0.0
    %186 = vmatpush1.msra.mxu0 0.0
    %187 = vmatprep.subr.mxu0 0.0
    %188 = vmatpush1.msra.mxu0 0.0
    %189 = vmatprep.subr.mxu0 0.0
    %190 = vmatpush1.msra.mxu0 0.0
    %191 = vmatprep.subr.mxu0 0.0
    %192 = vmatpush1.msra.mxu0 0.0
    %193 = vmatprep.subr.mxu0 0.0
    %194 = vmatpush1.msra.mxu0 0.0
    %195 = vmatprep.mubr.f32.mxu0 0.0
    %196 = vmatmul.mubr.f32.gmra.mrb[0].mxu0 %v48
    %v197 = vpop.f32.mrb[0].mxu0
    %v198 = vadd.f32 0.0, %v197
    %v199 = vpop.f32.mrb[0].mxu0
    %200 = vdwg.mxu0
    %v201 = vld [vmem:[%s2] ss:$4 sm:$0x7]
    %v203 = vlaneseq
    %v204 = vshrl.u32 %v203, 7
    %v205 = vsub.s32 0, %v204
    %v206 = vrot.slane %v201, %v205
    %v207 = vlaneseq
    %v208 = vshrl.u32 %v207, 7
    %v209 = vsub.s32 1, %v208
    %v210 = vrot.slane %v201, %v209
    %v211 = vlaneseq
    %v212 = vshrl.u32 %v211, 7
    %v213 = vsub.s32 2, %v212
    %v214 = vrot.slane %v201, %v213
    %v218 = vmul.f32 %v127, %v206
    %v219 = vmul.f32 %v129, %v210
    %v220 = vmul.f32 %v198, %v214
    %s221 = scalar_lea.vmem %s2, 1
    %v222 = vld [vmem:[%s221] ss:$4 sm:$0x7]
    %v224 = vlaneseq
    %v225 = vshrl.u32 %v224, 7
    %v226 = vsub.s32 0, %v225
    %v227 = vrot.slane %v222, %v226
    %v228 = vlaneseq
    %v229 = vshrl.u32 %v228, 7
    %v230 = vsub.s32 1, %v229
    %v231 = vrot.slane %v222, %v230
    %v232 = vlaneseq
    %v233 = vshrl.u32 %v232, 7
    %v234 = vsub.s32 2, %v233
    %v235 = vrot.slane %v222, %v234
    %v239 = vadd.f32 %v218, %v227
    %v240 = vadd.f32 %v219, %v231
    %v241 = vadd.f32 %v220, %v235
    %v242 = vmax.f32 %v239, 0.0
    %v243 = vmax.f32 %v240, 0.0
    %v244 = vmax.f32 %v241, 0.0
    %v245 = vld [vmem:[%s3] sm:$0xff]
    %v246 = vld [vmem:[%s3 + $0x8] sm:$0xff]
    %v247 = vld [vmem:[%s3 + $0x10] sm:$0xff]
    %v248 = vld [vmem:[%s3 + $0x18] sm:$0xff]
    %v249 = vld [vmem:[%s3 + $0x20] sm:$0xff]
    %v250 = vld [vmem:[%s3 + $0x28] sm:$0xff]
    %v251 = vld [vmem:[%s3 + $0x30] sm:$0xff]
    %v252 = vld [vmem:[%s3 + $0x38] sm:$0xff]
    %v253 = vld [vmem:[%s3 + $0x40] sm:$0xff]
    %v254 = vld [vmem:[%s3 + $0x48] sm:$0xff]
    %v255 = vld [vmem:[%s3 + $0x50] sm:$0xff]
    %v256 = vld [vmem:[%s3 + $0x58] sm:$0xff]
    %v257 = vld [vmem:[%s3 + $0x60] sm:$0xff]
    %v258 = vld [vmem:[%s3 + $0x68] sm:$0xff]
    %v259 = vld [vmem:[%s3 + $0x70] sm:$0xff]
    %v260 = vld [vmem:[%s3 + $0x78] sm:$0xff]
    %v261 = vld [vmem:[%s3 + $0x80] sm:$0xff]
    %v262 = vld [vmem:[%s3 + $0x88] sm:$0xff]
    %v263 = vld [vmem:[%s3 + $0x90] sm:$0xff]
    %v264 = vld [vmem:[%s3 + $0x98] sm:$0xff]
    %v265 = vld [vmem:[%s3 + $0xa0] sm:$0xff]
    %v266 = vld [vmem:[%s3 + $0xa8] sm:$0xff]
    %v267 = vld [vmem:[%s3 + $0xb0] sm:$0xff]
    %v268 = vld [vmem:[%s3 + $0xb8] sm:$0xff]
    %v269 = vld [vmem:[%s3 + $0xc0] sm:$0xff]
    %v270 = vld [vmem:[%s3 + $0xc8] sm:$0xff]
    %v271 = vld [vmem:[%s3 + $0xd0] sm:$0xff]
    %v272 = vld [vmem:[%s3 + $0xd8] sm:$0xff]
    %v273 = vld [vmem:[%s3 + $0xe0] sm:$0xff]
    %v274 = vld [vmem:[%s3 + $0xe8] sm:$0xff]
    %v275 = vld [vmem:[%s3 + $0xf0] sm:$0xff]
    %v276 = vld [vmem:[%s3 + $0xf8] sm:$0xff]
    %v277 = vld [vmem:[%s3 + $0x100] sm:$0xff]
    %v278 = vld [vmem:[%s3 + $0x108] sm:$0xff]
    %v279 = vld [vmem:[%s3 + $0x110] sm:$0xff]
    %v280 = vld [vmem:[%s3 + $0x118] sm:$0xff]
    %v281 = vld [vmem:[%s3 + $0x120] sm:$0xff]
    %v282 = vld [vmem:[%s3 + $0x128] sm:$0xff]
    %v283 = vld [vmem:[%s3 + $0x130] sm:$0xff]
    %v284 = vld [vmem:[%s3 + $0x138] sm:$0xff]
    %v285 = vld [vmem:[%s3 + $0x140] sm:$0xff]
    %v286 = vld [vmem:[%s3 + $0x148] sm:$0xff]
    %v287 = vld [vmem:[%s3 + $0x150] sm:$0xff]
    %v288 = vld [vmem:[%s3 + $0x158] sm:$0xff]
    %v289 = vld [vmem:[%s3 + $0x160] sm:$0xff]
    %v290 = vld [vmem:[%s3 + $0x168] sm:$0xff]
    %v291 = vld [vmem:[%s3 + $0x170] sm:$0xff]
    %v292 = vld [vmem:[%s3 + $0x178] sm:$0xff]
    %v293 = vld [vmem:[%s3 + $0x180] sm:$0xff]
    %v294 = vld [vmem:[%s3 + $0x188] sm:$0xff]
    %v295 = vld [vmem:[%s3 + $0x190] sm:$0xff]
    %v296 = vld [vmem:[%s3 + $0x198] sm:$0xff]
    %v297 = vld [vmem:[%s3 + $0x1a0] sm:$0xff]
    %v298 = vld [vmem:[%s3 + $0x1a8] sm:$0xff]
    %v299 = vld [vmem:[%s3 + $0x1b0] sm:$0xff]
    %v300 = vld [vmem:[%s3 + $0x1b8] sm:$0xff]
    %v301 = vld [vmem:[%s3 + $0x1c0] sm:$0xff]
    %v302 = vld [vmem:[%s3 + $0x1c8] sm:$0xff]
    %v303 = vld [vmem:[%s3 + $0x1d0] sm:$0xff]
    %v304 = vld [vmem:[%s3 + $0x1d8] sm:$0xff]
    %v305 = vld [vmem:[%s3 + $0x1e0] sm:$0xff]
    %v306 = vld [vmem:[%s3 + $0x1e8] sm:$0xff]
    %v307 = vld [vmem:[%s3 + $0x1f0] sm:$0xff]
    %v308 = vld [vmem:[%s3 + $0x1f8] sm:$0xff]
    %v309 = vld [vmem:[%s3 + $0x200] sm:$0xff]
    %v310 = vld [vmem:[%s3 + $0x208] sm:$0xff]
    %v311 = vld [vmem:[%s3 + $0x210] sm:$0xff]
    %v312 = vld [vmem:[%s3 + $0x218] sm:$0xff]
    %v313 = vld [vmem:[%s3 + $0x220] sm:$0xff]
    %v314 = vld [vmem:[%s3 + $0x228] sm:$0xff]
    %v315 = vld [vmem:[%s3 + $0x230] sm:$0xff]
    %v316 = vld [vmem:[%s3 + $0x238] sm:$0xff]
    %v317 = vld [vmem:[%s3 + $0x240] sm:$0xff]
    %v318 = vld [vmem:[%s3 + $0x248] sm:$0xff]
    %v319 = vld [vmem:[%s3 + $0x250] sm:$0xff]
    %v320 = vld [vmem:[%s3 + $0x258] sm:$0xff]
    %v321 = vld [vmem:[%s3 + $0x260] sm:$0xff]
    %v322 = vld [vmem:[%s3 + $0x268] sm:$0xff]
    %v323 = vld [vmem:[%s3 + $0x270] sm:$0xff]
    %v324 = vld [vmem:[%s3 + $0x278] sm:$0xff]
    %v325 = vld [vmem:[%s3 + $0x280] sm:$0xff]
    %v326 = vld [vmem:[%s3 + $0x288] sm:$0xff]
    %v327 = vld [vmem:[%s3 + $0x290] sm:$0xff]
    %v328 = vld [vmem:[%s3 + $0x298] sm:$0xff]
    %v329 = vld [vmem:[%s3 + $0x2a0] sm:$0xff]
    %v330 = vld [vmem:[%s3 + $0x2a8] sm:$0xff]
    %v331 = vld [vmem:[%s3 + $0x2b0] sm:$0xff]
    %v332 = vld [vmem:[%s3 + $0x2b8] sm:$0xff]
    %v333 = vld [vmem:[%s3 + $0x2c0] sm:$0xff]
    %v334 = vld [vmem:[%s3 + $0x2c8] sm:$0xff]
    %v335 = vld [vmem:[%s3 + $0x2d0] sm:$0xff]
    %v336 = vld [vmem:[%s3 + $0x2d8] sm:$0xff]
    %v337 = vld [vmem:[%s3 + $0x2e0] sm:$0xff]
    %v338 = vld [vmem:[%s3 + $0x2e8] sm:$0xff]
    %v339 = vld [vmem:[%s3 + $0x2f0] sm:$0xff]
    %v340 = vld [vmem:[%s3 + $0x2f8] sm:$0xff]
    %v341 = vld [vmem:[%s3 + $0x300] sm:$0xff]
    %v342 = vld [vmem:[%s3 + $0x308] sm:$0xff]
    %v343 = vld [vmem:[%s3 + $0x310] sm:$0xff]
    %v344 = vld [vmem:[%s3 + $0x318] sm:$0xff]
    %v345 = vld [vmem:[%s3 + $0x320] sm:$0xff]
    %v346 = vld [vmem:[%s3 + $0x328] sm:$0xff]
    %v347 = vld [vmem:[%s3 + $0x330] sm:$0xff]
    %v348 = vld [vmem:[%s3 + $0x338] sm:$0xff]
    %v349 = vld [vmem:[%s3 + $0x340] sm:$0xff]
    %v350 = vld [vmem:[%s3 + $0x348] sm:$0xff]
    %v351 = vld [vmem:[%s3 + $0x350] sm:$0xff]
    %v352 = vld [vmem:[%s3 + $0x358] sm:$0xff]
    %v353 = vld [vmem:[%s3 + $0x360] sm:$0xff]
    %v354 = vld [vmem:[%s3 + $0x368] sm:$0xff]
    %v355 = vld [vmem:[%s3 + $0x370] sm:$0xff]
    %v356 = vld [vmem:[%s3 + $0x378] sm:$0xff]
    %v357 = vld [vmem:[%s3 + $0x380] sm:$0xff]
    %v358 = vld [vmem:[%s3 + $0x388] sm:$0xff]
    %v359 = vld [vmem:[%s3 + $0x390] sm:$0xff]
    %v360 = vld [vmem:[%s3 + $0x398] sm:$0xff]
    %v361 = vld [vmem:[%s3 + $0x3a0] sm:$0xff]
    %v362 = vld [vmem:[%s3 + $0x3a8] sm:$0xff]
    %v363 = vld [vmem:[%s3 + $0x3b0] sm:$0xff]
    %v364 = vld [vmem:[%s3 + $0x3b8] sm:$0xff]
    %v365 = vld [vmem:[%s3 + $0x3c0] sm:$0xff]
    %v366 = vld [vmem:[%s3 + $0x3c8] sm:$0xff]
    %v367 = vld [vmem:[%s3 + $0x3d0] sm:$0xff]
    %v368 = vld [vmem:[%s3 + $0x3d8] sm:$0xff]
    %v369 = vld [vmem:[%s3 + $0x3e0] sm:$0xff]
    %v370 = vld [vmem:[%s3 + $0x3e8] sm:$0xff]
    %v371 = vld [vmem:[%s3 + $0x3f0] sm:$0xff]
    %v372 = vld [vmem:[%s3 + $0x3f8] sm:$0xff]
    %v373 = vld [vmem:[%s3 + $0x400] sm:$0xff]
    %v374 = vld [vmem:[%s3 + $0x408] sm:$0xff]
    %v375 = vld [vmem:[%s3 + $0x410] sm:$0xff]
    %v376 = vld [vmem:[%s3 + $0x418] sm:$0xff]
    %v377 = vld [vmem:[%s3 + $0x420] sm:$0xff]
    %v378 = vld [vmem:[%s3 + $0x428] sm:$0xff]
    %v379 = vld [vmem:[%s3 + $0x430] sm:$0xff]
    %v380 = vld [vmem:[%s3 + $0x438] sm:$0xff]
    %v381 = vld [vmem:[%s3 + $0x440] sm:$0xff]
    %v382 = vld [vmem:[%s3 + $0x448] sm:$0xff]
    %v383 = vld [vmem:[%s3 + $0x450] sm:$0xff]
    %v384 = vld [vmem:[%s3 + $0x458] sm:$0xff]
    %v385 = vld [vmem:[%s3 + $0x460] sm:$0xff]
    %v386 = vld [vmem:[%s3 + $0x468] sm:$0xff]
    %v387 = vld [vmem:[%s3 + $0x470] sm:$0xff]
    %v388 = vld [vmem:[%s3 + $0x478] sm:$0xff]
    %v389 = vld [vmem:[%s3 + $0x480] sm:$0xff]
    %v390 = vld [vmem:[%s3 + $0x488] sm:$0xff]
    %v391 = vld [vmem:[%s3 + $0x490] sm:$0xff]
    %v392 = vld [vmem:[%s3 + $0x498] sm:$0xff]
    %v393 = vld [vmem:[%s3 + $0x4a0] sm:$0xff]
    %v394 = vld [vmem:[%s3 + $0x4a8] sm:$0xff]
    %v395 = vld [vmem:[%s3 + $0x4b0] sm:$0xff]
    %v396 = vld [vmem:[%s3 + $0x4b8] sm:$0xff]
    %v397 = vld [vmem:[%s3 + $0x4c0] sm:$0xff]
    %v398 = vld [vmem:[%s3 + $0x4c8] sm:$0xff]
    %v399 = vld [vmem:[%s3 + $0x4d0] sm:$0xff]
    %v400 = vld [vmem:[%s3 + $0x4d8] sm:$0xff]
    %v401 = vld [vmem:[%s3 + $0x4e0] sm:$0xff]
    %v402 = vld [vmem:[%s3 + $0x4e8] sm:$0xff]
    %v403 = vld [vmem:[%s3 + $0x4f0] sm:$0xff]
    %v404 = vld [vmem:[%s3 + $0x4f8] sm:$0xff]
    %v405 = vld [vmem:[%s3 + $0x500] sm:$0xff]
    %v406 = vld [vmem:[%s3 + $0x508] sm:$0xff]
    %v407 = vld [vmem:[%s3 + $0x510] sm:$0xff]
    %v408 = vld [vmem:[%s3 + $0x518] sm:$0xff]
    %v409 = vld [vmem:[%s3 + $0x520] sm:$0xff]
    %v410 = vld [vmem:[%s3 + $0x528] sm:$0xff]
    %v411 = vld [vmem:[%s3 + $0x530] sm:$0xff]
    %v412 = vld [vmem:[%s3 + $0x538] sm:$0xff]
    %v413 = vld [vmem:[%s3 + $0x540] sm:$0xff]
    %v414 = vld [vmem:[%s3 + $0x548] sm:$0xff]
    %v415 = vld [vmem:[%s3 + $0x550] sm:$0xff]
    %v416 = vld [vmem:[%s3 + $0x558] sm:$0xff]
    %v417 = vld [vmem:[%s3 + $0x560] sm:$0xff]
    %v418 = vld [vmem:[%s3 + $0x568] sm:$0xff]
    %v419 = vld [vmem:[%s3 + $0x570] sm:$0xff]
    %v420 = vld [vmem:[%s3 + $0x578] sm:$0xff]
    %v421 = vld [vmem:[%s3 + $0x580] sm:$0xff]
    %v422 = vld [vmem:[%s3 + $0x588] sm:$0xff]
    %v423 = vld [vmem:[%s3 + $0x590] sm:$0xff]
    %v424 = vld [vmem:[%s3 + $0x598] sm:$0xff]
    %v425 = vld [vmem:[%s3 + $0x5a0] sm:$0xff]
    %v426 = vld [vmem:[%s3 + $0x5a8] sm:$0xff]
    %v427 = vld [vmem:[%s3 + $0x5b0] sm:$0xff]
    %v428 = vld [vmem:[%s3 + $0x5b8] sm:$0xff]
    %v429 = vld [vmem:[%s3 + $0x5c0] sm:$0xff]
    %v430 = vld [vmem:[%s3 + $0x5c8] sm:$0xff]
    %v431 = vld [vmem:[%s3 + $0x5d0] sm:$0xff]
    %v432 = vld [vmem:[%s3 + $0x5d8] sm:$0xff]
    %v433 = vld [vmem:[%s3 + $0x5e0] sm:$0xff]
    %v434 = vld [vmem:[%s3 + $0x5e8] sm:$0xff]
    %v435 = vld [vmem:[%s3 + $0x5f0] sm:$0xff]
    %v436 = vld [vmem:[%s3 + $0x5f8] sm:$0xff]
    %v437 = vld [vmem:[%s3 + $0x600] sm:$0xff]
    %v438 = vld [vmem:[%s3 + $0x608] sm:$0xff]
    %v439 = vld [vmem:[%s3 + $0x610] sm:$0xff]
    %v440 = vld [vmem:[%s3 + $0x618] sm:$0xff]
    %v441 = vld [vmem:[%s3 + $0x620] sm:$0xff]
    %v442 = vld [vmem:[%s3 + $0x628] sm:$0xff]
    %v443 = vld [vmem:[%s3 + $0x630] sm:$0xff]
    %v444 = vld [vmem:[%s3 + $0x638] sm:$0xff]
    %v445 = vld [vmem:[%s3 + $0x640] sm:$0xff]
    %v446 = vld [vmem:[%s3 + $0x648] sm:$0xff]
    %v447 = vld [vmem:[%s3 + $0x650] sm:$0xff]
    %v448 = vld [vmem:[%s3 + $0x658] sm:$0xff]
    %v449 = vld [vmem:[%s3 + $0x660] sm:$0xff]
    %v450 = vld [vmem:[%s3 + $0x668] sm:$0xff]
    %v451 = vld [vmem:[%s3 + $0x670] sm:$0xff]
    %v452 = vld [vmem:[%s3 + $0x678] sm:$0xff]
    %v453 = vld [vmem:[%s3 + $0x680] sm:$0xff]
    %v454 = vld [vmem:[%s3 + $0x688] sm:$0xff]
    %v455 = vld [vmem:[%s3 + $0x690] sm:$0xff]
    %v456 = vld [vmem:[%s3 + $0x698] sm:$0xff]
    %v457 = vld [vmem:[%s3 + $0x6a0] sm:$0xff]
    %v458 = vld [vmem:[%s3 + $0x6a8] sm:$0xff]
    %v459 = vld [vmem:[%s3 + $0x6b0] sm:$0xff]
    %v460 = vld [vmem:[%s3 + $0x6b8] sm:$0xff]
    %v461 = vld [vmem:[%s3 + $0x6c0] sm:$0xff]
    %v462 = vld [vmem:[%s3 + $0x6c8] sm:$0xff]
    %v463 = vld [vmem:[%s3 + $0x6d0] sm:$0xff]
    %v464 = vld [vmem:[%s3 + $0x6d8] sm:$0xff]
    %v465 = vld [vmem:[%s3 + $0x6e0] sm:$0xff]
    %v466 = vld [vmem:[%s3 + $0x6e8] sm:$0xff]
    %v467 = vld [vmem:[%s3 + $0x6f0] sm:$0xff]
    %v468 = vld [vmem:[%s3 + $0x6f8] sm:$0xff]
    %v469 = vld [vmem:[%s3 + $0x700] sm:$0xff]
    %v470 = vld [vmem:[%s3 + $0x708] sm:$0xff]
    %v471 = vld [vmem:[%s3 + $0x710] sm:$0xff]
    %v472 = vld [vmem:[%s3 + $0x718] sm:$0xff]
    %v473 = vld [vmem:[%s3 + $0x720] sm:$0xff]
    %v474 = vld [vmem:[%s3 + $0x728] sm:$0xff]
    %v475 = vld [vmem:[%s3 + $0x730] sm:$0xff]
    %v476 = vld [vmem:[%s3 + $0x738] sm:$0xff]
    %v477 = vld [vmem:[%s3 + $0x740] sm:$0xff]
    %v478 = vld [vmem:[%s3 + $0x748] sm:$0xff]
    %v479 = vld [vmem:[%s3 + $0x750] sm:$0xff]
    %v480 = vld [vmem:[%s3 + $0x758] sm:$0xff]
    %v481 = vld [vmem:[%s3 + $0x760] sm:$0xff]
    %v482 = vld [vmem:[%s3 + $0x768] sm:$0xff]
    %v483 = vld [vmem:[%s3 + $0x770] sm:$0xff]
    %v484 = vld [vmem:[%s3 + $0x778] sm:$0xff]
    %v485 = vld [vmem:[%s3 + $0x780] sm:$0xff]
    %v486 = vld [vmem:[%s3 + $0x788] sm:$0xff]
    %v487 = vld [vmem:[%s3 + $0x790] sm:$0xff]
    %v488 = vld [vmem:[%s3 + $0x798] sm:$0xff]
    %v489 = vld [vmem:[%s3 + $0x7a0] sm:$0xff]
    %v490 = vld [vmem:[%s3 + $0x7a8] sm:$0xff]
    %v491 = vld [vmem:[%s3 + $0x7b0] sm:$0xff]
    %v492 = vld [vmem:[%s3 + $0x7b8] sm:$0xff]
    %v493 = vld [vmem:[%s3 + $0x7c0] sm:$0xff]
    %v494 = vld [vmem:[%s3 + $0x7c8] sm:$0xff]
    %v495 = vld [vmem:[%s3 + $0x7d0] sm:$0xff]
    %v496 = vld [vmem:[%s3 + $0x7d8] sm:$0xff]
    %v497 = vld [vmem:[%s3 + $0x7e0] sm:$0xff]
    %v498 = vld [vmem:[%s3 + $0x7e8] sm:$0xff]
    %v499 = vld [vmem:[%s3 + $0x7f0] sm:$0xff]
    %v500 = vld [vmem:[%s3 + $0x7f8] sm:$0xff]
    %v501 = vld [vmem:[%s3 + $0x800] sm:$0xff]
    %v502 = vld [vmem:[%s3 + $0x808] sm:$0xff]
    %v503 = vld [vmem:[%s3 + $0x810] sm:$0xff]
    %v504 = vld [vmem:[%s3 + $0x818] sm:$0xff]
    %v505 = vld [vmem:[%s3 + $0x820] sm:$0xff]
    %v506 = vld [vmem:[%s3 + $0x828] sm:$0xff]
    %v507 = vld [vmem:[%s3 + $0x830] sm:$0xff]
    %v508 = vld [vmem:[%s3 + $0x838] sm:$0xff]
    %v509 = vld [vmem:[%s3 + $0x840] sm:$0xff]
    %v510 = vld [vmem:[%s3 + $0x848] sm:$0xff]
    %v511 = vld [vmem:[%s3 + $0x850] sm:$0xff]
    %v512 = vld [vmem:[%s3 + $0x858] sm:$0xff]
    %v513 = vld [vmem:[%s3 + $0x860] sm:$0xff]
    %v514 = vld [vmem:[%s3 + $0x868] sm:$0xff]
    %v515 = vld [vmem:[%s3 + $0x870] sm:$0xff]
    %v516 = vld [vmem:[%s3 + $0x878] sm:$0xff]
    %v517 = vld [vmem:[%s3 + $0x880] sm:$0xff]
    %v518 = vld [vmem:[%s3 + $0x888] sm:$0xff]
    %v519 = vld [vmem:[%s3 + $0x890] sm:$0xff]
    %v520 = vld [vmem:[%s3 + $0x898] sm:$0xff]
    %v521 = vld [vmem:[%s3 + $0x8a0] sm:$0xff]
    %v522 = vld [vmem:[%s3 + $0x8a8] sm:$0xff]
    %v523 = vld [vmem:[%s3 + $0x8b0] sm:$0xff]
    %v524 = vld [vmem:[%s3 + $0x8b8] sm:$0xff]
    %v525 = vld [vmem:[%s3 + $0x8c0] sm:$0xff]
    %v526 = vld [vmem:[%s3 + $0x8c8] sm:$0xff]
    %v527 = vld [vmem:[%s3 + $0x8d0] sm:$0xff]
    %v528 = vld [vmem:[%s3 + $0x8d8] sm:$0xff]
    %v529 = vld [vmem:[%s3 + $0x8e0] sm:$0xff]
    %v530 = vld [vmem:[%s3 + $0x8e8] sm:$0xff]
    %v531 = vld [vmem:[%s3 + $0x8f0] sm:$0xff]
    %v532 = vld [vmem:[%s3 + $0x8f8] sm:$0xff]
    %v533 = vld [vmem:[%s3 + $0x900] sm:$0xff]
    %v534 = vld [vmem:[%s3 + $0x908] sm:$0xff]
    %v535 = vld [vmem:[%s3 + $0x910] sm:$0xff]
    %v536 = vld [vmem:[%s3 + $0x918] sm:$0xff]
    %v537 = vld [vmem:[%s3 + $0x920] sm:$0xff]
    %v538 = vld [vmem:[%s3 + $0x928] sm:$0xff]
    %v539 = vld [vmem:[%s3 + $0x930] sm:$0xff]
    %v540 = vld [vmem:[%s3 + $0x938] sm:$0xff]
    %v541 = vld [vmem:[%s3 + $0x940] sm:$0xff]
    %v542 = vld [vmem:[%s3 + $0x948] sm:$0xff]
    %v543 = vld [vmem:[%s3 + $0x950] sm:$0xff]
    %v544 = vld [vmem:[%s3 + $0x958] sm:$0xff]
    %v545 = vld [vmem:[%s3 + $0x960] sm:$0xff]
    %v546 = vld [vmem:[%s3 + $0x968] sm:$0xff]
    %v547 = vld [vmem:[%s3 + $0x970] sm:$0xff]
    %v548 = vld [vmem:[%s3 + $0x978] sm:$0xff]
    %v549 = vld [vmem:[%s3 + $0x980] sm:$0xff]
    %v550 = vld [vmem:[%s3 + $0x988] sm:$0xff]
    %vm551 = vcmask 130048
    %v553 = vsel %vm551, %v244, 0
    %555 = vmatprep.subr.mxu0 %v246
    %556 = vmatpush1.msra.mxu0 %v245
    %557 = vmatprep.subr.mxu0 %v255
    %558 = vmatpush1.msra.mxu0 %v254
    %559 = vmatprep.subr.mxu0 %v264
    %560 = vmatpush1.msra.mxu0 %v263
    %561 = vmatprep.subr.mxu0 %v273
    %562 = vmatpush1.msra.mxu0 %v272
    %563 = vmatprep.subr.mxu0 %v282
    %564 = vmatpush1.msra.mxu0 %v281
    %565 = vmatprep.subr.mxu0 %v291
    %566 = vmatpush1.msra.mxu0 %v290
    %567 = vmatprep.subr.mxu0 %v300
    %568 = vmatpush1.msra.mxu0 %v299
    %569 = vmatprep.subr.mxu0 %v309
    %570 = vmatpush1.msra.mxu0 %v308
    %571 = vmatprep.subr.mxu0 %v318
    %572 = vmatpush1.msra.mxu0 %v317
    %573 = vmatprep.subr.mxu0 %v327
    %574 = vmatpush1.msra.mxu0 %v326
    %575 = vmatprep.subr.mxu0 %v336
    %576 = vmatpush1.msra.mxu0 %v335
    %577 = vmatprep.subr.mxu0 %v345
    %578 = vmatpush1.msra.mxu0 %v344
    %579 = vmatprep.subr.mxu0 %v354
    %580 = vmatpush1.msra.mxu0 %v353
    %581 = vmatprep.subr.mxu0 %v363
    %582 = vmatpush1.msra.mxu0 %v362
    %583 = vmatprep.subr.mxu0 %v372
    %584 = vmatpush1.msra.mxu0 %v371
    %585 = vmatprep.subr.mxu0 %v381
    %586 = vmatpush1.msra.mxu0 %v380
    %587 = vmatprep.subr.mxu0 %v390
    %588 = vmatpush1.msra.mxu0 %v389
    %589 = vmatprep.subr.mxu0 %v399
    %590 = vmatpush1.msra.mxu0 %v398
    %591 = vmatprep.subr.mxu0 %v408
    %592 = vmatpush1.msra.mxu0 %v407
    %593 = vmatprep.subr.mxu0 %v417
    %594 = vmatpush1.msra.mxu0 %v416
    %595 = vmatprep.subr.mxu0 %v426
    %596 = vmatpush1.msra.mxu0 %v425
    %597 = vmatprep.subr.mxu0 %v435
    %598 = vmatpush1.msra.mxu0 %v434
    %599 = vmatprep.subr.mxu0 %v444
    %600 = vmatpush1.msra.mxu0 %v443
    %601 = vmatprep.subr.mxu0 %v453
    %602 = vmatpush1.msra.mxu0 %v452
    %603 = vmatprep.subr.mxu0 %v462
    %604 = vmatpush1.msra.mxu0 %v461
    %605 = vmatprep.subr.mxu0 %v471
    %606 = vmatpush1.msra.mxu0 %v470
    %607 = vmatprep.subr.mxu0 %v480
    %608 = vmatpush1.msra.mxu0 %v479
    %609 = vmatprep.subr.mxu0 %v489
    %610 = vmatpush1.msra.mxu0 %v488
    %611 = vmatprep.subr.mxu0 %v498
    %612 = vmatpush1.msra.mxu0 %v497
    %613 = vmatprep.subr.mxu0 %v507
    %614 = vmatpush1.msra.mxu0 %v506
    %615 = vmatprep.subr.mxu0 %v516
    %616 = vmatpush1.msra.mxu0 %v515
    %617 = vmatprep.subr.mxu0 %v525
    %618 = vmatpush1.msra.mxu0 %v524
    %619 = vmatprep.mubr.f32.mxu0 %v243
    %620 = vmatmul.mubr.f32.gmra.mrb[0].mxu0 %v242
    %v621 = vpop.f32.mrb[0].mxu0
    %v622 = vadd.f32 0.0, %v621
    %v623 = vpop.f32.mrb[0].mxu0
    %v624 = vadd.f32 0.0, %v623
    %625 = vdwg.mxu0
    %626 = vmatprep.subr.mxu0 %v534
    %627 = vmatpush1.msra.mxu0 %v533
    %628 = vmatprep.subr.mxu0 %v543
    %629 = vmatpush1.msra.mxu0 %v542
    %630 = vmatprep.subr.mxu0 0.0
    %631 = vmatpush1.msra.mxu0 0.0
    %632 = vmatprep.subr.mxu0 0.0
    %633 = vmatpush1.msra.mxu0 0.0
    %634 = vmatprep.subr.mxu0 0.0
    %635 = vmatpush1.msra.mxu0 0.0
    %636 = vmatprep.subr.mxu0 0.0
    %637 = vmatpush1.msra.mxu0 0.0
    %638 = vmatprep.subr.mxu0 0.0
    %639 = vmatpush1.msra.mxu0 0.0
    %640 = vmatprep.subr.mxu0 0.0
    %641 = vmatpush1.msra.mxu0 0.0
    %642 = vmatprep.subr.mxu0 0.0
    %643 = vmatpush1.msra.mxu0 0.0
    %644 = vmatprep.subr.mxu0 0.0
    %645 = vmatpush1.msra.mxu0 0.0
    %646 = vmatprep.subr.mxu0 0.0
    %647 = vmatpush1.msra.mxu0 0.0
    %648 = vmatprep.subr.mxu0 0.0
    %649 = vmatpush1.msra.mxu0 0.0
    %650 = vmatprep.subr.mxu0 0.0
    %651 = vmatpush1.msra.mxu0 0.0
    %652 = vmatprep.subr.mxu0 0.0
    %653 = vmatpush1.msra.mxu0 0.0
    %654 = vmatprep.subr.mxu0 0.0
    %655 = vmatpush1.msra.mxu0 0.0
    %656 = vmatprep.subr.mxu0 0.0
    %657 = vmatpush1.msra.mxu0 0.0
    %658 = vmatprep.subr.mxu0 0.0
    %659 = vmatpush1.msra.mxu0 0.0
    %660 = vmatprep.subr.mxu0 0.0
    %661 = vmatpush1.msra.mxu0 0.0
    %662 = vmatprep.subr.mxu0 0.0
    %663 = vmatpush1.msra.mxu0 0.0
    %664 = vmatprep.subr.mxu0 0.0
    %665 = vmatpush1.msra.mxu0 0.0
    %666 = vmatprep.subr.mxu0 0.0
    %667 = vmatpush1.msra.mxu0 0.0
    %668 = vmatprep.subr.mxu0 0.0
    %669 = vmatpush1.msra.mxu0 0.0
    %670 = vmatprep.subr.mxu0 0.0
    %671 = vmatpush1.msra.mxu0 0.0
    %672 = vmatprep.subr.mxu0 0.0
    %673 = vmatpush1.msra.mxu0 0.0
    %674 = vmatprep.subr.mxu0 0.0
    %675 = vmatpush1.msra.mxu0 0.0
    %676 = vmatprep.subr.mxu0 0.0
    %677 = vmatpush1.msra.mxu0 0.0
    %678 = vmatprep.subr.mxu0 0.0
    %679 = vmatpush1.msra.mxu0 0.0
    %680 = vmatprep.subr.mxu0 0.0
    %681 = vmatpush1.msra.mxu0 0.0
    %682 = vmatprep.subr.mxu0 0.0
    %683 = vmatpush1.msra.mxu0 0.0
    %684 = vmatprep.subr.mxu0 0.0
    %685 = vmatpush1.msra.mxu0 0.0
    %686 = vmatprep.subr.mxu0 0.0
    %687 = vmatpush1.msra.mxu0 0.0
    %688 = vmatprep.subr.mxu0 0.0
    %689 = vmatpush1.msra.mxu0 0.0
    %690 = vmatprep.mubr.f32.mxu0 0.0
    %691 = vmatmul.mubr.f32.gmra.mrb[0].mxu0 %v553
    %v692 = vpop.f32.mrb[0].mxu0
    %v693 = vadd.f32 %v622, %v692
    %v694 = vpop.f32.mrb[0].mxu0
    %v695 = vadd.f32 %v624, %v694
    %696 = vdwg.mxu0
    %697 = vmatprep.subr.mxu0 %v248
    %698 = vmatpush1.msra.mxu0 %v247
    %699 = vmatprep.subr.mxu0 %v257
    %700 = vmatpush1.msra.mxu0 %v256
    %701 = vmatprep.subr.mxu0 %v266
    %702 = vmatpush1.msra.mxu0 %v265
    %703 = vmatprep.subr.mxu0 %v275
    %704 = vmatpush1.msra.mxu0 %v274
    %705 = vmatprep.subr.mxu0 %v284
    %706 = vmatpush1.msra.mxu0 %v283
    %707 = vmatprep.subr.mxu0 %v293
    %708 = vmatpush1.msra.mxu0 %v292
    %709 = vmatprep.subr.mxu0 %v302
    %710 = vmatpush1.msra.mxu0 %v301
    %711 = vmatprep.subr.mxu0 %v311
    %712 = vmatpush1.msra.mxu0 %v310
    %713 = vmatprep.subr.mxu0 %v320
    %714 = vmatpush1.msra.mxu0 %v319
    %715 = vmatprep.subr.mxu0 %v329
    %716 = vmatpush1.msra.mxu0 %v328
    %717 = vmatprep.subr.mxu0 %v338
    %718 = vmatpush1.msra.mxu0 %v337
    %719 = vmatprep.subr.mxu0 %v347
    %720 = vmatpush1.msra.mxu0 %v346
    %721 = vmatprep.subr.mxu0 %v356
    %722 = vmatpush1.msra.mxu0 %v355
    %723 = vmatprep.subr.mxu0 %v365
    %724 = vmatpush1.msra.mxu0 %v364
    %725 = vmatprep.subr.mxu0 %v374
    %726 = vmatpush1.msra.mxu0 %v373
    %727 = vmatprep.subr.mxu0 %v383
    %728 = vmatpush1.msra.mxu0 %v382
    %729 = vmatprep.subr.mxu0 %v392
    %730 = vmatpush1.msra.mxu0 %v391
    %731 = vmatprep.subr.mxu0 %v401
    %732 = vmatpush1.msra.mxu0 %v400
    %733 = vmatprep.subr.mxu0 %v410
    %734 = vmatpush1.msra.mxu0 %v409
    %735 = vmatprep.subr.mxu0 %v419
    %736 = vmatpush1.msra.mxu0 %v418
    %737 = vmatprep.subr.mxu0 %v428
    %738 = vmatpush1.msra.mxu0 %v427
    %739 = vmatprep.subr.mxu0 %v437
    %740 = vmatpush1.msra.mxu0 %v436
    %741 = vmatprep.subr.mxu0 %v446
    %742 = vmatpush1.msra.mxu0 %v445
    %743 = vmatprep.subr.mxu0 %v455
    %744 = vmatpush1.msra.mxu0 %v454
    %745 = vmatprep.subr.mxu0 %v464
    %746 = vmatpush1.msra.mxu0 %v463
    %747 = vmatprep.subr.mxu0 %v473
    %748 = vmatpush1.msra.mxu0 %v472
    %749 = vmatprep.subr.mxu0 %v482
    %750 = vmatpush1.msra.mxu0 %v481
    %751 = vmatprep.subr.mxu0 %v491
    %752 = vmatpush1.msra.mxu0 %v490
    %753 = vmatprep.subr.mxu0 %v500
    %754 = vmatpush1.msra.mxu0 %v499
    %755 = vmatprep.subr.mxu0 %v509
    %756 = vmatpush1.msra.mxu0 %v508
    %757 = vmatprep.subr.mxu0 %v518
    %758 = vmatpush1.msra.mxu0 %v517
    %759 = vmatprep.subr.mxu0 %v527
    %760 = vmatpush1.msra.mxu0 %v526
    %761 = vmatprep.mubr.f32.mxu0 %v243
    %762 = vmatmul.mubr.f32.gmra.mrb[0].mxu0 %v242
    %v763 = vpop.f32.mrb[0].mxu0
    %v764 = vadd.f32 0.0, %v763
    %v765 = vpop.f32.mrb[0].mxu0
    %v766 = vadd.f32 0.0, %v765
    %767 = vdwg.mxu0
    %768 = vmatprep.subr.mxu0 %v536
    %769 = vmatpush1.msra.mxu0 %v535
    %770 = vmatprep.subr.mxu0 %v545
    %771 = vmatpush1.msra.mxu0 %v544
    %772 = vmatprep.subr.mxu0 0.0
    %773 = vmatpush1.msra.mxu0 0.0
    %774 = vmatprep.subr.mxu0 0.0
    %775 = vmatpush1.msra.mxu0 0.0
    %776 = vmatprep.subr.mxu0 0.0
    %777 = vmatpush1.msra.mxu0 0.0
    %778 = vmatprep.subr.mxu0 0.0
    %779 = vmatpush1.msra.mxu0 0.0
    %780 = vmatprep.subr.mxu0 0.0
    %781 = vmatpush1.msra.mxu0 0.0
    %782 = vmatprep.subr.mxu0 0.0
    %783 = vmatpush1.msra.mxu0 0.0
    %784 = vmatprep.subr.mxu0 0.0
    %785 = vmatpush1.msra.mxu0 0.0
    %786 = vmatprep.subr.mxu0 0.0
    %787 = vmatpush1.msra.mxu0 0.0
    %788 = vmatprep.subr.mxu0 0.0
    %789 = vmatpush1.msra.mxu0 0.0
    %790 = vmatprep.subr.mxu0 0.0
    %791 = vmatpush1.msra.mxu0 0.0
    %792 = vmatprep.subr.mxu0 0.0
    %793 = vmatpush1.msra.mxu0 0.0
    %794 = vmatprep.subr.mxu0 0.0
    %795 = vmatpush1.msra.mxu0 0.0
    %796 = vmatprep.subr.mxu0 0.0
    %797 = vmatpush1.msra.mxu0 0.0
    %798 = vmatprep.subr.mxu0 0.0
    %799 = vmatpush1.msra.mxu0 0.0
    %800 = vmatprep.subr.mxu0 0.0
    %801 = vmatpush1.msra.mxu0 0.0
    %802 = vmatprep.subr.mxu0 0.0
    %803 = vmatpush1.msra.mxu0 0.0
    %804 = vmatprep.subr.mxu0 0.0
    %805 = vmatpush1.msra.mxu0 0.0
    %806 = vmatprep.subr.mxu0 0.0
    %807 = vmatpush1.msra.mxu0 0.0
    %808 = vmatprep.subr.mxu0 0.0
    %809 = vmatpush1.msra.mxu0 0.0
    %810 = vmatprep.subr.mxu0 0.0
    %811 = vmatpush1.msra.mxu0 0.0
    %812 = vmatprep.subr.mxu0 0.0
    %813 = vmatpush1.msra.mxu0 0.0
    %814 = vmatprep.subr.mxu0 0.0
    %815 = vmatpush1.msra.mxu0 0.0
    %816 = vmatprep.subr.mxu0 0.0
    %817 = vmatpush1.msra.mxu0 0.0
    %818 = vmatprep.subr.mxu0 0.0
    %819 = vmatpush1.msra.mxu0 0.0
    %820 = vmatprep.subr.mxu0 0.0
    %821 = vmatpush1.msra.mxu0 0.0
    %822 = vmatprep.subr.mxu0 0.0
    %823 = vmatpush1.msra.mxu0 0.0
    %824 = vmatprep.subr.mxu0 0.0
    %825 = vmatpush1.msra.mxu0 0.0
    %826 = vmatprep.subr.mxu0 0.0
    %827 = vmatpush1.msra.mxu0 0.0
    %828 = vmatprep.subr.mxu0 0.0
    %829 = vmatpush1.msra.mxu0 0.0
    %830 = vmatprep.subr.mxu0 0.0
    %831 = vmatpush1.msra.mxu0 0.0
    %832 = vmatprep.mubr.f32.mxu0 0.0
    %833 = vmatmul.mubr.f32.gmra.mrb[0].mxu0 %v553
    %v834 = vpop.f32.mrb[0].mxu0
    %v835 = vadd.f32 %v764, %v834
    %v836 = vpop.f32.mrb[0].mxu0
    %v837 = vadd.f32 %v766, %v836
    %838 = vdwg.mxu0
    %839 = vmatprep.subr.mxu0 %v250
    %840 = vmatpush1.msra.mxu0 %v249
    %841 = vmatprep.subr.mxu0 %v259
    %842 = vmatpush1.msra.mxu0 %v258
    %843 = vmatprep.subr.mxu0 %v268
    %844 = vmatpush1.msra.mxu0 %v267
    %845 = vmatprep.subr.mxu0 %v277
    %846 = vmatpush1.msra.mxu0 %v276
    %847 = vmatprep.subr.mxu0 %v286
    %848 = vmatpush1.msra.mxu0 %v285
    %849 = vmatprep.subr.mxu0 %v295
    %850 = vmatpush1.msra.mxu0 %v294
    %851 = vmatprep.subr.mxu0 %v304
    %852 = vmatpush1.msra.mxu0 %v303
    %853 = vmatprep.subr.mxu0 %v313
    %854 = vmatpush1.msra.mxu0 %v312
    %855 = vmatprep.subr.mxu0 %v322
    %856 = vmatpush1.msra.mxu0 %v321
    %857 = vmatprep.subr.mxu0 %v331
    %858 = vmatpush1.msra.mxu0 %v330
    %859 = vmatprep.subr.mxu0 %v340
    %860 = vmatpush1.msra.mxu0 %v339
    %861 = vmatprep.subr.mxu0 %v349
    %862 = vmatpush1.msra.mxu0 %v348
    %863 = vmatprep.subr.mxu0 %v358
    %864 = vmatpush1.msra.mxu0 %v357
    %865 = vmatprep.subr.mxu0 %v367
    %866 = vmatpush1.msra.mxu0 %v366
    %867 = vmatprep.subr.mxu0 %v376
    %868 = vmatpush1.msra.mxu0 %v375
    %869 = vmatprep.subr.mxu0 %v385
    %870 = vmatpush1.msra.mxu0 %v384
    %871 = vmatprep.subr.mxu0 %v394
    %872 = vmatpush1.msra.mxu0 %v393
    %873 = vmatprep.subr.mxu0 %v403
    %874 = vmatpush1.msra.mxu0 %v402
    %875 = vmatprep.subr.mxu0 %v412
    %876 = vmatpush1.msra.mxu0 %v411
    %877 = vmatprep.subr.mxu0 %v421
    %878 = vmatpush1.msra.mxu0 %v420
    %879 = vmatprep.subr.mxu0 %v430
    %880 = vmatpush1.msra.mxu0 %v429
    %881 = vmatprep.subr.mxu0 %v439
    %882 = vmatpush1.msra.mxu0 %v438
    %883 = vmatprep.subr.mxu0 %v448
    %884 = vmatpush1.msra.mxu0 %v447
    %885 = vmatprep.subr.mxu0 %v457
    %886 = vmatpush1.msra.mxu0 %v456
    %887 = vmatprep.subr.mxu0 %v466
    %888 = vmatpush1.msra.mxu0 %v465
    %889 = vmatprep.subr.mxu0 %v475
    %890 = vmatpush1.msra.mxu0 %v474
    %891 = vmatprep.subr.mxu0 %v484
    %892 = vmatpush1.msra.mxu0 %v483
    %893 = vmatprep.subr.mxu0 %v493
    %894 = vmatpush1.msra.mxu0 %v492
    %895 = vmatprep.subr.mxu0 %v502
    %896 = vmatpush1.msra.mxu0 %v501
    %897 = vmatprep.subr.mxu0 %v511
    %898 = vmatpush1.msra.mxu0 %v510
    %899 = vmatprep.subr.mxu0 %v520
    %900 = vmatpush1.msra.mxu0 %v519
    %901 = vmatprep.subr.mxu0 %v529
    %902 = vmatpush1.msra.mxu0 %v528
    %903 = vmatprep.mubr.f32.mxu0 %v243
    %904 = vmatmul.mubr.f32.gmra.mrb[0].mxu0 %v242
    %v905 = vpop.f32.mrb[0].mxu0
    %v906 = vadd.f32 0.0, %v905
    %v907 = vpop.f32.mrb[0].mxu0
    %v908 = vadd.f32 0.0, %v907
    %909 = vdwg.mxu0
    %910 = vmatprep.subr.mxu0 %v538
    %911 = vmatpush1.msra.mxu0 %v537
    %912 = vmatprep.subr.mxu0 %v547
    %913 = vmatpush1.msra.mxu0 %v546
    %914 = vmatprep.subr.mxu0 0.0
    %915 = vmatpush1.msra.mxu0 0.0
    %916 = vmatprep.subr.mxu0 0.0
    %917 = vmatpush1.msra.mxu0 0.0
    %918 = vmatprep.subr.mxu0 0.0
    %919 = vmatpush1.msra.mxu0 0.0
    %920 = vmatprep.subr.mxu0 0.0
    %921 = vmatpush1.msra.mxu0 0.0
    %922 = vmatprep.subr.mxu0 0.0
    %923 = vmatpush1.msra.mxu0 0.0
    %924 = vmatprep.subr.mxu0 0.0
    %925 = vmatpush1.msra.mxu0 0.0
    %926 = vmatprep.subr.mxu0 0.0
    %927 = vmatpush1.msra.mxu0 0.0
    %928 = vmatprep.subr.mxu0 0.0
    %929 = vmatpush1.msra.mxu0 0.0
    %930 = vmatprep.subr.mxu0 0.0
    %931 = vmatpush1.msra.mxu0 0.0
    %932 = vmatprep.subr.mxu0 0.0
    %933 = vmatpush1.msra.mxu0 0.0
    %934 = vmatprep.subr.mxu0 0.0
    %935 = vmatpush1.msra.mxu0 0.0
    %936 = vmatprep.subr.mxu0 0.0
    %937 = vmatpush1.msra.mxu0 0.0
    %938 = vmatprep.subr.mxu0 0.0
    %939 = vmatpush1.msra.mxu0 0.0
    %940 = vmatprep.subr.mxu0 0.0
    %941 = vmatpush1.msra.mxu0 0.0
    %942 = vmatprep.subr.mxu0 0.0
    %943 = vmatpush1.msra.mxu0 0.0
    %944 = vmatprep.subr.mxu0 0.0
    %945 = vmatpush1.msra.mxu0 0.0
    %946 = vmatprep.subr.mxu0 0.0
    %947 = vmatpush1.msra.mxu0 0.0
    %948 = vmatprep.subr.mxu0 0.0
    %949 = vmatpush1.msra.mxu0 0.0
    %950 = vmatprep.subr.mxu0 0.0
    %951 = vmatpush1.msra.mxu0 0.0
    %952 = vmatprep.subr.mxu0 0.0
    %953 = vmatpush1.msra.mxu0 0.0
    %954 = vmatprep.subr.mxu0 0.0
    %955 = vmatpush1.msra.mxu0 0.0
    %956 = vmatprep.subr.mxu0 0.0
    %957 = vmatpush1.msra.mxu0 0.0
    %958 = vmatprep.subr.mxu0 0.0
    %959 = vmatpush1.msra.mxu0 0.0
    %960 = vmatprep.subr.mxu0 0.0
    %961 = vmatpush1.msra.mxu0 0.0
    %962 = vmatprep.subr.mxu0 0.0
    %963 = vmatpush1.msra.mxu0 0.0
    %964 = vmatprep.subr.mxu0 0.0
    %965 = vmatpush1.msra.mxu0 0.0
    %966 = vmatprep.subr.mxu0 0.0
    %967 = vmatpush1.msra.mxu0 0.0
    %968 = vmatprep.subr.mxu0 0.0
    %969 = vmatpush1.msra.mxu0 0.0
    %970 = vmatprep.subr.mxu0 0.0
    %971 = vmatpush1.msra.mxu0 0.0
    %972 = vmatprep.subr.mxu0 0.0
    %973 = vmatpush1.msra.mxu0 0.0
    %974 = vmatprep.mubr.f32.mxu0 0.0
    %975 = vmatmul.mubr.f32.gmra.mrb[0].mxu0 %v553
    %v976 = vpop.f32.mrb[0].mxu0
    %v977 = vadd.f32 %v906, %v976
    %v978 = vpop.f32.mrb[0].mxu0
    %v979 = vadd.f32 %v908, %v978
    %980 = vdwg.mxu0
    %981 = vmatprep.subr.mxu0 %v252
    %982 = vmatpush1.msra.mxu0 %v251
    %983 = vmatprep.subr.mxu0 %v261
    %984 = vmatpush1.msra.mxu0 %v260
    %985 = vmatprep.subr.mxu0 %v270
    %986 = vmatpush1.msra.mxu0 %v269
    %987 = vmatprep.subr.mxu0 %v279
    %988 = vmatpush1.msra.mxu0 %v278
    %989 = vmatprep.subr.mxu0 %v288
    %990 = vmatpush1.msra.mxu0 %v287
    %991 = vmatprep.subr.mxu0 %v297
    %992 = vmatpush1.msra.mxu0 %v296
    %993 = vmatprep.subr.mxu0 %v306
    %994 = vmatpush1.msra.mxu0 %v305
    %995 = vmatprep.subr.mxu0 %v315
    %996 = vmatpush1.msra.mxu0 %v314
    %997 = vmatprep.subr.mxu0 %v324
    %998 = vmatpush1.msra.mxu0 %v323
    %999 = vmatprep.subr.mxu0 %v333
    %1000 = vmatpush1.msra.mxu0 %v332
    %1001 = vmatprep.subr.mxu0 %v342
    %1002 = vmatpush1.msra.mxu0 %v341
    %1003 = vmatprep.subr.mxu0 %v351
    %1004 = vmatpush1.msra.mxu0 %v350
    %1005 = vmatprep.subr.mxu0 %v360
    %1006 = vmatpush1.msra.mxu0 %v359
    %1007 = vmatprep.subr.mxu0 %v369
    %1008 = vmatpush1.msra.mxu0 %v368
    %1009 = vmatprep.subr.mxu0 %v378
    %1010 = vmatpush1.msra.mxu0 %v377
    %1011 = vmatprep.subr.mxu0 %v387
    %1012 = vmatpush1.msra.mxu0 %v386
    %1013 = vmatprep.subr.mxu0 %v396
    %1014 = vmatpush1.msra.mxu0 %v395
    %1015 = vmatprep.subr.mxu0 %v405
    %1016 = vmatpush1.msra.mxu0 %v404
    %1017 = vmatprep.subr.mxu0 %v414
    %1018 = vmatpush1.msra.mxu0 %v413
    %1019 = vmatprep.subr.mxu0 %v423
    %1020 = vmatpush1.msra.mxu0 %v422
    %1021 = vmatprep.subr.mxu0 %v432
    %1022 = vmatpush1.msra.mxu0 %v431
    %1023 = vmatprep.subr.mxu0 %v441
    %1024 = vmatpush1.msra.mxu0 %v440
    %1025 = vmatprep.subr.mxu0 %v450
    %1026 = vmatpush1.msra.mxu0 %v449
    %1027 = vmatprep.subr.mxu0 %v459
    %1028 = vmatpush1.msra.mxu0 %v458
    %1029 = vmatprep.subr.mxu0 %v468
    %1030 = vmatpush1.msra.mxu0 %v467
    %1031 = vmatprep.subr.mxu0 %v477
    %1032 = vmatpush1.msra.mxu0 %v476
    %1033 = vmatprep.subr.mxu0 %v486
    %1034 = vmatpush1.msra.mxu0 %v485
    %1035 = vmatprep.subr.mxu0 %v495
    %1036 = vmatpush1.msra.mxu0 %v494
    %1037 = vmatprep.subr.mxu0 %v504
    %1038 = vmatpush1.msra.mxu0 %v503
    %1039 = vmatprep.subr.mxu0 %v513
    %1040 = vmatpush1.msra.mxu0 %v512
    %1041 = vmatprep.subr.mxu0 %v522
    %1042 = vmatpush1.msra.mxu0 %v521
    %1043 = vmatprep.subr.mxu0 %v531
    %1044 = vmatpush1.msra.mxu0 %v530
    %1045 = vmatprep.mubr.f32.mxu0 %v243
    %1046 = vmatmul.mubr.f32.gmra.mrb[0].mxu0 %v242
    %v1047 = vpop.f32.mrb[0].mxu0
    %v1048 = vadd.f32 0.0, %v1047
    %v1049 = vpop.f32.mrb[0].mxu0
    %v1050 = vadd.f32 0.0, %v1049
    %1051 = vdwg.mxu0
    %1052 = vmatprep.subr.mxu0 %v540
    %1053 = vmatpush1.msra.mxu0 %v539
    %1054 = vmatprep.subr.mxu0 %v549
    %1055 = vmatpush1.msra.mxu0 %v548
    %1056 = vmatprep.subr.mxu0 0.0
    %1057 = vmatpush1.msra.mxu0 0.0
    %1058 = vmatprep.subr.mxu0 0.0
    %1059 = vmatpush1.msra.mxu0 0.0
    %1060 = vmatprep.subr.mxu0 0.0
    %1061 = vmatpush1.msra.mxu0 0.0
    %1062 = vmatprep.subr.mxu0 0.0
    %1063 = vmatpush1.msra.mxu0 0.0
    %1064 = vmatprep.subr.mxu0 0.0
    %1065 = vmatpush1.msra.mxu0 0.0
    %1066 = vmatprep.subr.mxu0 0.0
    %1067 = vmatpush1.msra.mxu0 0.0
    %1068 = vmatprep.subr.mxu0 0.0
    %1069 = vmatpush1.msra.mxu0 0.0
    %1070 = vmatprep.subr.mxu0 0.0
    %1071 = vmatpush1.msra.mxu0 0.0
    %1072 = vmatprep.subr.mxu0 0.0
    %1073 = vmatpush1.msra.mxu0 0.0
    %1074 = vmatprep.subr.mxu0 0.0
    %1075 = vmatpush1.msra.mxu0 0.0
    %1076 = vmatprep.subr.mxu0 0.0
    %1077 = vmatpush1.msra.mxu0 0.0
    %1078 = vmatprep.subr.mxu0 0.0
    %1079 = vmatpush1.msra.mxu0 0.0
    %1080 = vmatprep.subr.mxu0 0.0
    %1081 = vmatpush1.msra.mxu0 0.0
    %1082 = vmatprep.subr.mxu0 0.0
    %1083 = vmatpush1.msra.mxu0 0.0
    %1084 = vmatprep.subr.mxu0 0.0
    %1085 = vmatpush1.msra.mxu0 0.0
    %1086 = vmatprep.subr.mxu0 0.0
    %1087 = vmatpush1.msra.mxu0 0.0
    %1088 = vmatprep.subr.mxu0 0.0
    %1089 = vmatpush1.msra.mxu0 0.0
    %1090 = vmatprep.subr.mxu0 0.0
    %1091 = vmatpush1.msra.mxu0 0.0
    %1092 = vmatprep.subr.mxu0 0.0
    %1093 = vmatpush1.msra.mxu0 0.0
    %1094 = vmatprep.subr.mxu0 0.0
    %1095 = vmatpush1.msra.mxu0 0.0
    %1096 = vmatprep.subr.mxu0 0.0
    %1097 = vmatpush1.msra.mxu0 0.0
    %1098 = vmatprep.subr.mxu0 0.0
    %1099 = vmatpush1.msra.mxu0 0.0
    %1100 = vmatprep.subr.mxu0 0.0
    %1101 = vmatpush1.msra.mxu0 0.0
    %1102 = vmatprep.subr.mxu0 0.0
    %1103 = vmatpush1.msra.mxu0 0.0
    %1104 = vmatprep.subr.mxu0 0.0
    %1105 = vmatpush1.msra.mxu0 0.0
    %1106 = vmatprep.subr.mxu0 0.0
    %1107 = vmatpush1.msra.mxu0 0.0
    %1108 = vmatprep.subr.mxu0 0.0
    %1109 = vmatpush1.msra.mxu0 0.0
    %1110 = vmatprep.subr.mxu0 0.0
    %1111 = vmatpush1.msra.mxu0 0.0
    %1112 = vmatprep.subr.mxu0 0.0
    %1113 = vmatpush1.msra.mxu0 0.0
    %1114 = vmatprep.subr.mxu0 0.0
    %1115 = vmatpush1.msra.mxu0 0.0
    %1116 = vmatprep.mubr.f32.mxu0 0.0
    %1117 = vmatmul.mubr.f32.gmra.mrb[0].mxu0 %v553
    %v1118 = vpop.f32.mrb[0].mxu0
    %v1119 = vadd.f32 %v1048, %v1118
    %v1120 = vpop.f32.mrb[0].mxu0
    %v1121 = vadd.f32 %v1050, %v1120
    %1122 = vdwg.mxu0
    %1123 = vmatprep.subr.mxu0 0.0
    %1124 = vmatpush1.msra.mxu0 %v253
    %1125 = vmatprep.subr.mxu0 0.0
    %1126 = vmatpush1.msra.mxu0 %v262
    %1127 = vmatprep.subr.mxu0 0.0
    %1128 = vmatpush1.msra.mxu0 %v271
    %1129 = vmatprep.subr.mxu0 0.0
    %1130 = vmatpush1.msra.mxu0 %v280
    %1131 = vmatprep.subr.mxu0 0.0
    %1132 = vmatpush1.msra.mxu0 %v289
    %1133 = vmatprep.subr.mxu0 0.0
    %1134 = vmatpush1.msra.mxu0 %v298
    %1135 = vmatprep.subr.mxu0 0.0
    %1136 = vmatpush1.msra.mxu0 %v307
    %1137 = vmatprep.subr.mxu0 0.0
    %1138 = vmatpush1.msra.mxu0 %v316
    %1139 = vmatprep.subr.mxu0 0.0
    %1140 = vmatpush1.msra.mxu0 %v325
    %1141 = vmatprep.subr.mxu0 0.0
    %1142 = vmatpush1.msra.mxu0 %v334
    %1143 = vmatprep.subr.mxu0 0.0
    %1144 = vmatpush1.msra.mxu0 %v343
    %1145 = vmatprep.subr.mxu0 0.0
    %1146 = vmatpush1.msra.mxu0 %v352
    %1147 = vmatprep.subr.mxu0 0.0
    %1148 = vmatpush1.msra.mxu0 %v361
    %1149 = vmatprep.subr.mxu0 0.0
    %1150 = vmatpush1.msra.mxu0 %v370
    %1151 = vmatprep.subr.mxu0 0.0
    %1152 = vmatpush1.msra.mxu0 %v379
    %1153 = vmatprep.subr.mxu0 0.0
    %1154 = vmatpush1.msra.mxu0 %v388
    %1155 = vmatprep.subr.mxu0 0.0
    %1156 = vmatpush1.msra.mxu0 %v397
    %1157 = vmatprep.subr.mxu0 0.0
    %1158 = vmatpush1.msra.mxu0 %v406
    %1159 = vmatprep.subr.mxu0 0.0
    %1160 = vmatpush1.msra.mxu0 %v415
    %1161 = vmatprep.subr.mxu0 0.0
    %1162 = vmatpush1.msra.mxu0 %v424
    %1163 = vmatprep.subr.mxu0 0.0
    %1164 = vmatpush1.msra.mxu0 %v433
    %1165 = vmatprep.subr.mxu0 0.0
    %1166 = vmatpush1.msra.mxu0 %v442
    %1167 = vmatprep.subr.mxu0 0.0
    %1168 = vmatpush1.msra.mxu0 %v451
    %1169 = vmatprep.subr.mxu0 0.0
    %1170 = vmatpush1.msra.mxu0 %v460
    %1171 = vmatprep.subr.mxu0 0.0
    %1172 = vmatpush1.msra.mxu0 %v469
    %1173 = vmatprep.subr.mxu0 0.0
    %1174 = vmatpush1.msra.mxu0 %v478
    %1175 = vmatprep.subr.mxu0 0.0
    %1176 = vmatpush1.msra.mxu0 %v487
    %1177 = vmatprep.subr.mxu0 0.0
    %1178 = vmatpush1.msra.mxu0 %v496
    %1179 = vmatprep.subr.mxu0 0.0
    %1180 = vmatpush1.msra.mxu0 %v505
    %1181 = vmatprep.subr.mxu0 0.0
    %1182 = vmatpush1.msra.mxu0 %v514
    %1183 = vmatprep.subr.mxu0 0.0
    %1184 = vmatpush1.msra.mxu0 %v523
    %1185 = vmatprep.subr.mxu0 0.0
    %1186 = vmatpush1.msra.mxu0 %v532
    %1187 = vmatprep.mubr.f32.mxu0 %v243
    %1188 = vmatmul.mubr.f32.gmra.mrb[0].mxu0 %v242
    %v1189 = vpop.f32.mrb[0].mxu0
    %v1190 = vadd.f32 0.0, %v1189
    %v1191 = vpop.f32.mrb[0].mxu0
    %1192 = vdwg.mxu0
    %1193 = vmatprep.subr.mxu0 0.0
    %1194 = vmatpush1.msra.mxu0 %v541
    %1195 = vmatprep.subr.mxu0 0.0
    %1196 = vmatpush1.msra.mxu0 %v550
    %1197 = vmatprep.subr.mxu0 0.0
    %1198 = vmatpush1.msra.mxu0 0.0
    %1199 = vmatprep.subr.mxu0 0.0
    %1200 = vmatpush1.msra.mxu0 0.0
    %1201 = vmatprep.subr.mxu0 0.0
    %1202 = vmatpush1.msra.mxu0 0.0
    %1203 = vmatprep.subr.mxu0 0.0
    %1204 = vmatpush1.msra.mxu0 0.0
    %1205 = vmatprep.subr.mxu0 0.0
    %1206 = vmatpush1.msra.mxu0 0.0
    %1207 = vmatprep.subr.mxu0 0.0
    %1208 = vmatpush1.msra.mxu0 0.0
    %1209 = vmatprep.subr.mxu0 0.0
    %1210 = vmatpush1.msra.mxu0 0.0
    %1211 = vmatprep.subr.mxu0 0.0
    %1212 = vmatpush1.msra.mxu0 0.0
    %1213 = vmatprep.subr.mxu0 0.0
    %1214 = vmatpush1.msra.mxu0 0.0
    %1215 = vmatprep.subr.mxu0 0.0
    %1216 = vmatpush1.msra.mxu0 0.0
    %1217 = vmatprep.subr.mxu0 0.0
    %1218 = vmatpush1.msra.mxu0 0.0
    %1219 = vmatprep.subr.mxu0 0.0
    %1220 = vmatpush1.msra.mxu0 0.0
    %1221 = vmatprep.subr.mxu0 0.0
    %1222 = vmatpush1.msra.mxu0 0.0
    %1223 = vmatprep.subr.mxu0 0.0
    %1224 = vmatpush1.msra.mxu0 0.0
    %1225 = vmatprep.subr.mxu0 0.0
    %1226 = vmatpush1.msra.mxu0 0.0
    %1227 = vmatprep.subr.mxu0 0.0
    %1228 = vmatpush1.msra.mxu0 0.0
    %1229 = vmatprep.subr.mxu0 0.0
    %1230 = vmatpush1.msra.mxu0 0.0
    %1231 = vmatprep.subr.mxu0 0.0
    %1232 = vmatpush1.msra.mxu0 0.0
    %1233 = vmatprep.subr.mxu0 0.0
    %1234 = vmatpush1.msra.mxu0 0.0
    %1235 = vmatprep.subr.mxu0 0.0
    %1236 = vmatpush1.msra.mxu0 0.0
    %1237 = vmatprep.subr.mxu0 0.0
    %1238 = vmatpush1.msra.mxu0 0.0
    %1239 = vmatprep.subr.mxu0 0.0
    %1240 = vmatpush1.msra.mxu0 0.0
    %1241 = vmatprep.subr.mxu0 0.0
    %1242 = vmatpush1.msra.mxu0 0.0
    %1243 = vmatprep.subr.mxu0 0.0
    %1244 = vmatpush1.msra.mxu0 0.0
    %1245 = vmatprep.subr.mxu0 0.0
    %1246 = vmatpush1.msra.mxu0 0.0
    %1247 = vmatprep.subr.mxu0 0.0
    %1248 = vmatpush1.msra.mxu0 0.0
    %1249 = vmatprep.subr.mxu0 0.0
    %1250 = vmatpush1.msra.mxu0 0.0
    %1251 = vmatprep.subr.mxu0 0.0
    %1252 = vmatpush1.msra.mxu0 0.0
    %1253 = vmatprep.subr.mxu0 0.0
    %1254 = vmatpush1.msra.mxu0 0.0
    %1255 = vmatprep.subr.mxu0 0.0
    %1256 = vmatpush1.msra.mxu0 0.0
    %1257 = vmatprep.mubr.f32.mxu0 0.0
    %1258 = vmatmul.mubr.f32.gmra.mrb[0].mxu0 %v553
    %v1259 = vpop.f32.mrb[0].mxu0
    %v1260 = vadd.f32 %v1190, %v1259
    %v1261 = vpop.f32.mrb[0].mxu0
    %1262 = vdwg.mxu0
    %v1263 = vld [vmem:[%s4] ss:$2 sm:$0xff]
    %s1264 = scalar_lea.vmem %s4, 16
    %v1265 = vld [vmem:[%s1264] ss:$2 sm:$0x1]
    %v1268 = vlaneseq
    %v1269 = vshrl.u32 %v1268, 7
    %v1270 = vsub.s32 0, %v1269
    %v1271 = vrot.slane %v1263, %v1270
    %v1272 = vlaneseq
    %v1273 = vshrl.u32 %v1272, 7
    %v1274 = vsub.s32 1, %v1273
    %v1275 = vrot.slane %v1263, %v1274
    %v1276 = vlaneseq
    %v1277 = vshrl.u32 %v1276, 7
    %v1278 = vsub.s32 2, %v1277
    %v1279 = vrot.slane %v1263, %v1278
    %v1280 = vlaneseq
    %v1281 = vshrl.u32 %v1280, 7
    %v1282 = vsub.s32 3, %v1281
    %v1283 = vrot.slane %v1263, %v1282
    %v1284 = vlaneseq
    %v1285 = vshrl.u32 %v1284, 7
    %v1286 = vsub.s32 4, %v1285
    %v1287 = vrot.slane %v1263, %v1286
    %v1288 = vlaneseq
    %v1289 = vshrl.u32 %v1288, 7
    %v1290 = vsub.s32 5, %v1289
    %v1291 = vrot.slane %v1263, %v1290
    %v1292 = vlaneseq
    %v1293 = vshrl.u32 %v1292, 7
    %v1294 = vsub.s32 6, %v1293
    %v1295 = vrot.slane %v1263, %v1294
    %v1296 = vlaneseq
    %v1297 = vshrl.u32 %v1296, 7
    %v1298 = vsub.s32 7, %v1297
    %v1299 = vrot.slane %v1263, %v1298
    %v1300 = vlaneseq
    %v1301 = vshrl.u32 %v1300, 7
    %v1302 = vsub.s32 0, %v1301
    %v1303 = vrot.slane %v1265, %v1302
    %v1313 = vmul.f32 %v693, %v1271
    %v1314 = vmul.f32 %v695, %v1275
    %v1315 = vmul.f32 %v835, %v1279
    %v1316 = vmul.f32 %v837, %v1283
    %v1317 = vmul.f32 %v977, %v1287
    %v1318 = vmul.f32 %v979, %v1291
    %v1319 = vmul.f32 %v1119, %v1295
    %v1320 = vmul.f32 %v1121, %v1299
    %v1321 = vmul.f32 %v1260, %v1303
    %s1322 = scalar_lea.vmem %s4, 1
    %v1323 = vld [vmem:[%s1322] ss:$2 sm:$0xff]
    %s1324 = scalar_lea.vmem %s4, 17
    %v1325 = vld [vmem:[%s1324] ss:$2 sm:$0x1]
    %v1328 = vlaneseq
    %v1329 = vshrl.u32 %v1328, 7
    %v1330 = vsub.s32 0, %v1329
    %v1331 = vrot.slane %v1323, %v1330
    %v1332 = vlaneseq
    %v1333 = vshrl.u32 %v1332, 7
    %v1334 = vsub.s32 1, %v1333
    %v1335 = vrot.slane %v1323, %v1334
    %v1336 = vlaneseq
    %v1337 = vshrl.u32 %v1336, 7
    %v1338 = vsub.s32 2, %v1337
    %v1339 = vrot.slane %v1323, %v1338
    %v1340 = vlaneseq
    %v1341 = vshrl.u32 %v1340, 7
    %v1342 = vsub.s32 3, %v1341
    %v1343 = vrot.slane %v1323, %v1342
    %v1344 = vlaneseq
    %v1345 = vshrl.u32 %v1344, 7
    %v1346 = vsub.s32 4, %v1345
    %v1347 = vrot.slane %v1323, %v1346
    %v1348 = vlaneseq
    %v1349 = vshrl.u32 %v1348, 7
    %v1350 = vsub.s32 5, %v1349
    %v1351 = vrot.slane %v1323, %v1350
    %v1352 = vlaneseq
    %v1353 = vshrl.u32 %v1352, 7
    %v1354 = vsub.s32 6, %v1353
    %v1355 = vrot.slane %v1323, %v1354
    %v1356 = vlaneseq
    %v1357 = vshrl.u32 %v1356, 7
    %v1358 = vsub.s32 7, %v1357
    %v1359 = vrot.slane %v1323, %v1358
    %v1360 = vlaneseq
    %v1361 = vshrl.u32 %v1360, 7
    %v1362 = vsub.s32 0, %v1361
    %v1363 = vrot.slane %v1325, %v1362
    %v1373 = vadd.f32 %v1313, %v1331
    %v1374 = vadd.f32 %v1314, %v1335
    %v1375 = vadd.f32 %v1315, %v1339
    %v1376 = vadd.f32 %v1316, %v1343
    %v1377 = vadd.f32 %v1317, %v1347
    %v1378 = vadd.f32 %v1318, %v1351
    %v1379 = vadd.f32 %v1319, %v1355
    %v1380 = vadd.f32 %v1320, %v1359
    %v1381 = vadd.f32 %v1321, %v1363
    %v1382 = vmax.f32 %v1373, 0.0
    %v1383 = vmax.f32 %v1374, 0.0
    %v1384 = vmax.f32 %v1375, 0.0
    %v1385 = vmax.f32 %v1376, 0.0
    %v1386 = vmax.f32 %v1377, 0.0
    %v1387 = vmax.f32 %v1378, 0.0
    %v1388 = vmax.f32 %v1379, 0.0
    %v1389 = vmax.f32 %v1380, 0.0
    %v1390 = vmax.f32 %v1381, 0.0
    %v1391 = vld [vmem:[%s5] sm:$0xff]
    %v1392 = vld [vmem:[%s5 + $0x8] sm:$0xff]
    %v1393 = vld [vmem:[%s5 + $0x10] sm:$0xff]
    %v1394 = vld [vmem:[%s5 + $0x18] sm:$0xff]
    %v1395 = vld [vmem:[%s5 + $0x20] sm:$0xff]
    %v1396 = vld [vmem:[%s5 + $0x28] sm:$0xff]
    %v1397 = vld [vmem:[%s5 + $0x30] sm:$0xff]
    %v1398 = vld [vmem:[%s5 + $0x38] sm:$0xff]
    %v1399 = vld [vmem:[%s5 + $0x40] sm:$0xff]
    %v1400 = vld [vmem:[%s5 + $0x48] sm:$0xff]
    %v1401 = vld [vmem:[%s5 + $0x50] sm:$0xff]
    %v1402 = vld [vmem:[%s5 + $0x58] sm:$0xff]
    %v1403 = vld [vmem:[%s5 + $0x60] sm:$0xff]
    %v1404 = vld [vmem:[%s5 + $0x68] sm:$0xff]
    %v1405 = vld [vmem:[%s5 + $0x70] sm:$0xff]
    %v1406 = vld [vmem:[%s5 + $0x78] sm:$0xff]
    %v1407 = vld [vmem:[%s5 + $0x80] sm:$0xff]
    %v1408 = vld [vmem:[%s5 + $0x88] sm:$0xff]
    %v1409 = vld [vmem:[%s5 + $0x90] sm:$0xff]
    %v1410 = vld [vmem:[%s5 + $0x98] sm:$0xff]
    %v1411 = vld [vmem:[%s5 + $0xa0] sm:$0xff]
    %v1412 = vld [vmem:[%s5 + $0xa8] sm:$0xff]
    %v1413 = vld [vmem:[%s5 + $0xb0] sm:$0xff]
    %v1414 = vld [vmem:[%s5 + $0xb8] sm:$0xff]
    %v1415 = vld [vmem:[%s5 + $0xc0] sm:$0xff]
    %v1416 = vld [vmem:[%s5 + $0xc8] sm:$0xff]
    %v1417 = vld [vmem:[%s5 + $0xd0] sm:$0xff]
    %v1418 = vld [vmem:[%s5 + $0xd8] sm:$0xff]
    %v1419 = vld [vmem:[%s5 + $0xe0] sm:$0xff]
    %v1420 = vld [vmem:[%s5 + $0xe8] sm:$0xff]
    %v1421 = vld [vmem:[%s5 + $0xf0] sm:$0xff]
    %v1422 = vld [vmem:[%s5 + $0xf8] sm:$0xff]
    %v1423 = vld [vmem:[%s5 + $0x100] sm:$0xff]
    %v1424 = vld [vmem:[%s5 + $0x108] sm:$0xff]
    %v1425 = vld [vmem:[%s5 + $0x110] sm:$0xff]
    %v1426 = vld [vmem:[%s5 + $0x118] sm:$0xff]
    %v1427 = vld [vmem:[%s5 + $0x120] sm:$0xff]
    %v1428 = vld [vmem:[%s5 + $0x128] sm:$0xff]
    %v1429 = vld [vmem:[%s5 + $0x130] sm:$0xff]
    %v1430 = vld [vmem:[%s5 + $0x138] sm:$0xff]
    %v1431 = vld [vmem:[%s5 + $0x140] sm:$0xff]
    %v1432 = vld [vmem:[%s5 + $0x148] sm:$0xff]
    %v1433 = vld [vmem:[%s5 + $0x150] sm:$0xff]
    %v1434 = vld [vmem:[%s5 + $0x158] sm:$0xff]
    %v1435 = vld [vmem:[%s5 + $0x160] sm:$0xff]
    %v1436 = vld [vmem:[%s5 + $0x168] sm:$0xff]
    %v1437 = vld [vmem:[%s5 + $0x170] sm:$0xff]
    %v1438 = vld [vmem:[%s5 + $0x178] sm:$0xff]
    %v1439 = vld [vmem:[%s5 + $0x180] sm:$0xff]
    %v1440 = vld [vmem:[%s5 + $0x188] sm:$0xff]
    %v1441 = vld [vmem:[%s5 + $0x190] sm:$0xff]
    %v1442 = vld [vmem:[%s5 + $0x198] sm:$0xff]
    %v1443 = vld [vmem:[%s5 + $0x1a0] sm:$0xff]
    %v1444 = vld [vmem:[%s5 + $0x1a8] sm:$0xff]
    %v1445 = vld [vmem:[%s5 + $0x1b0] sm:$0xff]
    %v1446 = vld [vmem:[%s5 + $0x1b8] sm:$0xff]
    %v1447 = vld [vmem:[%s5 + $0x1c0] sm:$0xff]
    %v1448 = vld [vmem:[%s5 + $0x1c8] sm:$0xff]
    %v1449 = vld [vmem:[%s5 + $0x1d0] sm:$0xff]
    %v1450 = vld [vmem:[%s5 + $0x1d8] sm:$0xff]
    %v1451 = vld [vmem:[%s5 + $0x1e0] sm:$0xff]
    %v1452 = vld [vmem:[%s5 + $0x1e8] sm:$0xff]
    %v1453 = vld [vmem:[%s5 + $0x1f0] sm:$0xff]
    %v1454 = vld [vmem:[%s5 + $0x1f8] sm:$0xff]
    %v1455 = vld [vmem:[%s5 + $0x200] sm:$0xff]
    %v1456 = vld [vmem:[%s5 + $0x208] sm:$0xff]
    %v1457 = vld [vmem:[%s5 + $0x210] sm:$0xff]
    %v1458 = vld [vmem:[%s5 + $0x218] sm:$0xff]
    %v1459 = vld [vmem:[%s5 + $0x220] sm:$0xff]
    %v1460 = vld [vmem:[%s5 + $0x228] sm:$0xff]
    %v1461 = vld [vmem:[%s5 + $0x230] sm:$0xff]
    %v1462 = vld [vmem:[%s5 + $0x238] sm:$0xff]
    %v1463 = vld [vmem:[%s5 + $0x240] sm:$0xff]
    %v1464 = vld [vmem:[%s5 + $0x248] sm:$0xff]
    %v1465 = vld [vmem:[%s5 + $0x250] sm:$0xff]
    %v1466 = vld [vmem:[%s5 + $0x258] sm:$0xff]
    %v1467 = vld [vmem:[%s5 + $0x260] sm:$0xff]
    %v1468 = vld [vmem:[%s5 + $0x268] sm:$0xff]
    %v1469 = vld [vmem:[%s5 + $0x270] sm:$0xff]
    %v1470 = vld [vmem:[%s5 + $0x278] sm:$0xff]
    %v1471 = vld [vmem:[%s5 + $0x280] sm:$0xff]
    %v1472 = vld [vmem:[%s5 + $0x288] sm:$0xff]
    %v1473 = vld [vmem:[%s5 + $0x290] sm:$0xff]
    %v1474 = vld [vmem:[%s5 + $0x298] sm:$0xff]
    %v1475 = vld [vmem:[%s5 + $0x2a0] sm:$0xff]
    %v1476 = vld [vmem:[%s5 + $0x2a8] sm:$0xff]
    %v1477 = vld [vmem:[%s5 + $0x2b0] sm:$0xff]
    %v1478 = vld [vmem:[%s5 + $0x2b8] sm:$0xff]
    %v1479 = vld [vmem:[%s5 + $0x2c0] sm:$0xff]
    %v1480 = vld [vmem:[%s5 + $0x2c8] sm:$0xff]
    %v1481 = vld [vmem:[%s5 + $0x2d0] sm:$0xff]
    %v1482 = vld [vmem:[%s5 + $0x2d8] sm:$0xff]
    %v1483 = vld [vmem:[%s5 + $0x2e0] sm:$0xff]
    %v1484 = vld [vmem:[%s5 + $0x2e8] sm:$0xff]
    %v1485 = vld [vmem:[%s5 + $0x2f0] sm:$0xff]
    %v1486 = vld [vmem:[%s5 + $0x2f8] sm:$0xff]
    %v1487 = vld [vmem:[%s5 + $0x300] sm:$0xff]
    %v1488 = vld [vmem:[%s5 + $0x308] sm:$0xff]
    %v1489 = vld [vmem:[%s5 + $0x310] sm:$0xff]
    %v1490 = vld [vmem:[%s5 + $0x318] sm:$0xff]
    %v1491 = vld [vmem:[%s5 + $0x320] sm:$0xff]
    %v1492 = vld [vmem:[%s5 + $0x328] sm:$0xff]
    %v1493 = vld [vmem:[%s5 + $0x330] sm:$0xff]
    %v1494 = vld [vmem:[%s5 + $0x338] sm:$0xff]
    %v1495 = vld [vmem:[%s5 + $0x340] sm:$0xff]
    %v1496 = vld [vmem:[%s5 + $0x348] sm:$0xff]
    %v1497 = vld [vmem:[%s5 + $0x350] sm:$0xff]
    %v1498 = vld [vmem:[%s5 + $0x358] sm:$0xff]
    %v1499 = vld [vmem:[%s5 + $0x360] sm:$0xff]
    %v1500 = vld [vmem:[%s5 + $0x368] sm:$0xff]
    %v1501 = vld [vmem:[%s5 + $0x370] sm:$0xff]
    %v1502 = vld [vmem:[%s5 + $0x378] sm:$0xff]
    %v1503 = vld [vmem:[%s5 + $0x380] sm:$0xff]
    %v1504 = vld [vmem:[%s5 + $0x388] sm:$0xff]
    %v1505 = vld [vmem:[%s5 + $0x390] sm:$0xff]
    %v1506 = vld [vmem:[%s5 + $0x398] sm:$0xff]
    %v1507 = vld [vmem:[%s5 + $0x3a0] sm:$0xff]
    %v1508 = vld [vmem:[%s5 + $0x3a8] sm:$0xff]
    %v1509 = vld [vmem:[%s5 + $0x3b0] sm:$0xff]
    %v1510 = vld [vmem:[%s5 + $0x3b8] sm:$0xff]
    %v1511 = vld [vmem:[%s5 + $0x3c0] sm:$0xff]
    %v1512 = vld [vmem:[%s5 + $0x3c8] sm:$0xff]
    %v1513 = vld [vmem:[%s5 + $0x3d0] sm:$0xff]
    %v1514 = vld [vmem:[%s5 + $0x3d8] sm:$0xff]
    %v1515 = vld [vmem:[%s5 + $0x3e0] sm:$0xff]
    %v1516 = vld [vmem:[%s5 + $0x3e8] sm:$0xff]
    %v1517 = vld [vmem:[%s5 + $0x3f0] sm:$0xff]
    %v1518 = vld [vmem:[%s5 + $0x3f8] sm:$0xff]
    %v1519 = vld [vmem:[%s5 + $0x400] sm:$0xff]
    %v1520 = vld [vmem:[%s5 + $0x408] sm:$0xff]
    %v1521 = vld [vmem:[%s5 + $0x410] sm:$0xff]
    %v1522 = vld [vmem:[%s5 + $0x418] sm:$0xff]
    %v1523 = vld [vmem:[%s5 + $0x420] sm:$0xff]
    %v1524 = vld [vmem:[%s5 + $0x428] sm:$0xff]
    %v1525 = vld [vmem:[%s5 + $0x430] sm:$0xff]
    %v1526 = vld [vmem:[%s5 + $0x438] sm:$0xff]
    %v1527 = vld [vmem:[%s5 + $0x440] sm:$0xff]
    %v1528 = vld [vmem:[%s5 + $0x448] sm:$0xff]
    %v1529 = vld [vmem:[%s5 + $0x450] sm:$0xff]
    %v1530 = vld [vmem:[%s5 + $0x458] sm:$0xff]
    %v1531 = vld [vmem:[%s5 + $0x460] sm:$0xff]
    %v1532 = vld [vmem:[%s5 + $0x468] sm:$0xff]
    %v1533 = vld [vmem:[%s5 + $0x470] sm:$0xff]
    %v1534 = vld [vmem:[%s5 + $0x478] sm:$0xff]
    %v1535 = vld [vmem:[%s5 + $0x480] sm:$0xff]
    %v1536 = vld [vmem:[%s5 + $0x488] sm:$0xff]
    %v1537 = vld [vmem:[%s5 + $0x490] sm:$0xff]
    %v1538 = vld [vmem:[%s5 + $0x498] sm:$0xff]
    %v1539 = vld [vmem:[%s5 + $0x4a0] sm:$0xff]
    %v1540 = vld [vmem:[%s5 + $0x4a8] sm:$0xff]
    %v1541 = vld [vmem:[%s5 + $0x4b0] sm:$0xff]
    %v1542 = vld [vmem:[%s5 + $0x4b8] sm:$0xff]
    %v1543 = vld [vmem:[%s5 + $0x4c0] sm:$0xff]
    %v1544 = vld [vmem:[%s5 + $0x4c8] sm:$0xff]
    %v1545 = vld [vmem:[%s5 + $0x4d0] sm:$0xff]
    %v1546 = vld [vmem:[%s5 + $0x4d8] sm:$0xff]
    %v1547 = vld [vmem:[%s5 + $0x4e0] sm:$0xff]
    %v1548 = vld [vmem:[%s5 + $0x4e8] sm:$0xff]
    %v1549 = vld [vmem:[%s5 + $0x4f0] sm:$0xff]
    %v1550 = vld [vmem:[%s5 + $0x4f8] sm:$0xff]
    %v1551 = vld [vmem:[%s5 + $0x500] sm:$0xff]
    %v1552 = vld [vmem:[%s5 + $0x508] sm:$0xff]
    %v1553 = vld [vmem:[%s5 + $0x510] sm:$0xff]
    %v1554 = vld [vmem:[%s5 + $0x518] sm:$0xff]
    %v1555 = vld [vmem:[%s5 + $0x520] sm:$0xff]
    %v1556 = vld [vmem:[%s5 + $0x528] sm:$0xff]
    %v1557 = vld [vmem:[%s5 + $0x530] sm:$0xff]
    %v1558 = vld [vmem:[%s5 + $0x538] sm:$0xff]
    %v1559 = vld [vmem:[%s5 + $0x540] sm:$0xff]
    %v1560 = vld [vmem:[%s5 + $0x548] sm:$0xff]
    %v1561 = vld [vmem:[%s5 + $0x550] sm:$0xff]
    %v1562 = vld [vmem:[%s5 + $0x558] sm:$0xff]
    %v1563 = vld [vmem:[%s5 + $0x560] sm:$0xff]
    %v1564 = vld [vmem:[%s5 + $0x568] sm:$0xff]
    %v1565 = vld [vmem:[%s5 + $0x570] sm:$0xff]
    %v1566 = vld [vmem:[%s5 + $0x578] sm:$0xff]
    %v1567 = vld [vmem:[%s5 + $0x580] sm:$0xff]
    %v1568 = vld [vmem:[%s5 + $0x588] sm:$0xff]
    %v1569 = vld [vmem:[%s5 + $0x590] sm:$0xff]
    %v1570 = vld [vmem:[%s5 + $0x598] sm:$0xff]
    %v1571 = vld [vmem:[%s5 + $0x5a0] sm:$0xff]
    %v1572 = vld [vmem:[%s5 + $0x5a8] sm:$0xff]
    %v1573 = vld [vmem:[%s5 + $0x5b0] sm:$0xff]
    %v1574 = vld [vmem:[%s5 + $0x5b8] sm:$0xff]
    %v1575 = vld [vmem:[%s5 + $0x5c0] sm:$0xff]
    %v1576 = vld [vmem:[%s5 + $0x5c8] sm:$0xff]
    %v1577 = vld [vmem:[%s5 + $0x5d0] sm:$0xff]
    %v1578 = vld [vmem:[%s5 + $0x5d8] sm:$0xff]
    %v1579 = vld [vmem:[%s5 + $0x5e0] sm:$0xff]
    %v1580 = vld [vmem:[%s5 + $0x5e8] sm:$0xff]
    %v1581 = vld [vmem:[%s5 + $0x5f0] sm:$0xff]
    %v1582 = vld [vmem:[%s5 + $0x5f8] sm:$0xff]
    %v1583 = vld [vmem:[%s5 + $0x600] sm:$0xff]
    %v1584 = vld [vmem:[%s5 + $0x608] sm:$0xff]
    %v1585 = vld [vmem:[%s5 + $0x610] sm:$0xff]
    %v1586 = vld [vmem:[%s5 + $0x618] sm:$0xff]
    %v1587 = vld [vmem:[%s5 + $0x620] sm:$0xff]
    %v1588 = vld [vmem:[%s5 + $0x628] sm:$0xff]
    %v1589 = vld [vmem:[%s5 + $0x630] sm:$0xff]
    %v1590 = vld [vmem:[%s5 + $0x638] sm:$0xff]
    %v1591 = vld [vmem:[%s5 + $0x640] sm:$0xff]
    %v1592 = vld [vmem:[%s5 + $0x648] sm:$0xff]
    %v1593 = vld [vmem:[%s5 + $0x650] sm:$0xff]
    %v1594 = vld [vmem:[%s5 + $0x658] sm:$0xff]
    %v1595 = vld [vmem:[%s5 + $0x660] sm:$0xff]
    %v1596 = vld [vmem:[%s5 + $0x668] sm:$0xff]
    %v1597 = vld [vmem:[%s5 + $0x670] sm:$0xff]
    %v1598 = vld [vmem:[%s5 + $0x678] sm:$0xff]
    %v1599 = vld [vmem:[%s5 + $0x680] sm:$0xff]
    %v1600 = vld [vmem:[%s5 + $0x688] sm:$0xff]
    %v1601 = vld [vmem:[%s5 + $0x690] sm:$0xff]
    %v1602 = vld [vmem:[%s5 + $0x698] sm:$0xff]
    %v1603 = vld [vmem:[%s5 + $0x6a0] sm:$0xff]
    %v1604 = vld [vmem:[%s5 + $0x6a8] sm:$0xff]
    %v1605 = vld [vmem:[%s5 + $0x6b0] sm:$0xff]
    %v1606 = vld [vmem:[%s5 + $0x6b8] sm:$0xff]
    %v1607 = vld [vmem:[%s5 + $0x6c0] sm:$0xff]
    %v1608 = vld [vmem:[%s5 + $0x6c8] sm:$0xff]
    %v1609 = vld [vmem:[%s5 + $0x6d0] sm:$0xff]
    %v1610 = vld [vmem:[%s5 + $0x6d8] sm:$0xff]
    %v1611 = vld [vmem:[%s5 + $0x6e0] sm:$0xff]
    %v1612 = vld [vmem:[%s5 + $0x6e8] sm:$0xff]
    %v1613 = vld [vmem:[%s5 + $0x6f0] sm:$0xff]
    %v1614 = vld [vmem:[%s5 + $0x6f8] sm:$0xff]
    %v1615 = vld [vmem:[%s5 + $0x700] sm:$0xff]
    %v1616 = vld [vmem:[%s5 + $0x708] sm:$0xff]
    %v1617 = vld [vmem:[%s5 + $0x710] sm:$0xff]
    %v1618 = vld [vmem:[%s5 + $0x718] sm:$0xff]
    %v1619 = vld [vmem:[%s5 + $0x720] sm:$0xff]
    %v1620 = vld [vmem:[%s5 + $0x728] sm:$0xff]
    %v1621 = vld [vmem:[%s5 + $0x730] sm:$0xff]
    %v1622 = vld [vmem:[%s5 + $0x738] sm:$0xff]
    %v1623 = vld [vmem:[%s5 + $0x740] sm:$0xff]
    %v1624 = vld [vmem:[%s5 + $0x748] sm:$0xff]
    %v1625 = vld [vmem:[%s5 + $0x750] sm:$0xff]
    %v1626 = vld [vmem:[%s5 + $0x758] sm:$0xff]
    %v1627 = vld [vmem:[%s5 + $0x760] sm:$0xff]
    %v1628 = vld [vmem:[%s5 + $0x768] sm:$0xff]
    %v1629 = vld [vmem:[%s5 + $0x770] sm:$0xff]
    %v1630 = vld [vmem:[%s5 + $0x778] sm:$0xff]
    %v1631 = vld [vmem:[%s5 + $0x780] sm:$0xff]
    %v1632 = vld [vmem:[%s5 + $0x788] sm:$0xff]
    %v1633 = vld [vmem:[%s5 + $0x790] sm:$0xff]
    %v1634 = vld [vmem:[%s5 + $0x798] sm:$0xff]
    %v1635 = vld [vmem:[%s5 + $0x7a0] sm:$0xff]
    %v1636 = vld [vmem:[%s5 + $0x7a8] sm:$0xff]
    %v1637 = vld [vmem:[%s5 + $0x7b0] sm:$0xff]
    %v1638 = vld [vmem:[%s5 + $0x7b8] sm:$0xff]
    %v1639 = vld [vmem:[%s5 + $0x7c0] sm:$0xff]
    %v1640 = vld [vmem:[%s5 + $0x7c8] sm:$0xff]
    %v1641 = vld [vmem:[%s5 + $0x7d0] sm:$0xff]
    %v1642 = vld [vmem:[%s5 + $0x7d8] sm:$0xff]
    %v1643 = vld [vmem:[%s5 + $0x7e0] sm:$0xff]
    %v1644 = vld [vmem:[%s5 + $0x7e8] sm:$0xff]
    %v1645 = vld [vmem:[%s5 + $0x7f0] sm:$0xff]
    %v1646 = vld [vmem:[%s5 + $0x7f8] sm:$0xff]
    %v1647 = vld [vmem:[%s5 + $0x800] sm:$0xff]
    %v1648 = vld [vmem:[%s5 + $0x808] sm:$0xff]
    %v1649 = vld [vmem:[%s5 + $0x810] sm:$0xff]
    %v1650 = vld [vmem:[%s5 + $0x818] sm:$0xff]
    %v1651 = vld [vmem:[%s5 + $0x820] sm:$0xff]
    %v1652 = vld [vmem:[%s5 + $0x828] sm:$0xff]
    %v1653 = vld [vmem:[%s5 + $0x830] sm:$0xff]
    %v1654 = vld [vmem:[%s5 + $0x838] sm:$0xff]
    %v1655 = vld [vmem:[%s5 + $0x840] sm:$0xff]
    %v1656 = vld [vmem:[%s5 + $0x848] sm:$0xff]
    %v1657 = vld [vmem:[%s5 + $0x850] sm:$0xff]
    %v1658 = vld [vmem:[%s5 + $0x858] sm:$0xff]
    %v1659 = vld [vmem:[%s5 + $0x860] sm:$0xff]
    %v1660 = vld [vmem:[%s5 + $0x868] sm:$0xff]
    %v1661 = vld [vmem:[%s5 + $0x870] sm:$0xff]
    %v1662 = vld [vmem:[%s5 + $0x878] sm:$0xff]
    %v1663 = vld [vmem:[%s5 + $0x880] sm:$0xff]
    %v1664 = vld [vmem:[%s5 + $0x888] sm:$0xff]
    %v1665 = vld [vmem:[%s5 + $0x890] sm:$0xff]
    %v1666 = vld [vmem:[%s5 + $0x898] sm:$0xff]
    %v1667 = vld [vmem:[%s5 + $0x8a0] sm:$0xff]
    %v1668 = vld [vmem:[%s5 + $0x8a8] sm:$0xff]
    %v1669 = vld [vmem:[%s5 + $0x8b0] sm:$0xff]
    %v1670 = vld [vmem:[%s5 + $0x8b8] sm:$0xff]
    %v1671 = vld [vmem:[%s5 + $0x8c0] sm:$0xff]
    %v1672 = vld [vmem:[%s5 + $0x8c8] sm:$0xff]
    %v1673 = vld [vmem:[%s5 + $0x8d0] sm:$0xff]
    %v1674 = vld [vmem:[%s5 + $0x8d8] sm:$0xff]
    %v1675 = vld [vmem:[%s5 + $0x8e0] sm:$0xff]
    %v1676 = vld [vmem:[%s5 + $0x8e8] sm:$0xff]
    %v1677 = vld [vmem:[%s5 + $0x8f0] sm:$0xff]
    %v1678 = vld [vmem:[%s5 + $0x8f8] sm:$0xff]
    %v1679 = vld [vmem:[%s5 + $0x900] sm:$0xff]
    %v1680 = vld [vmem:[%s5 + $0x908] sm:$0xff]
    %v1681 = vld [vmem:[%s5 + $0x910] sm:$0xff]
    %v1682 = vld [vmem:[%s5 + $0x918] sm:$0xff]
    %v1683 = vld [vmem:[%s5 + $0x920] sm:$0xff]
    %v1684 = vld [vmem:[%s5 + $0x928] sm:$0xff]
    %v1685 = vld [vmem:[%s5 + $0x930] sm:$0xff]
    %v1686 = vld [vmem:[%s5 + $0x938] sm:$0xff]
    %v1687 = vld [vmem:[%s5 + $0x940] sm:$0xff]
    %v1688 = vld [vmem:[%s5 + $0x948] sm:$0xff]
    %v1689 = vld [vmem:[%s5 + $0x950] sm:$0xff]
    %v1690 = vld [vmem:[%s5 + $0x958] sm:$0xff]
    %v1691 = vld [vmem:[%s5 + $0x960] sm:$0xff]
    %v1692 = vld [vmem:[%s5 + $0x968] sm:$0xff]
    %v1693 = vld [vmem:[%s5 + $0x970] sm:$0xff]
    %v1694 = vld [vmem:[%s5 + $0x978] sm:$0xff]
    %v1695 = vld [vmem:[%s5 + $0x980] sm:$0xff]
    %v1696 = vld [vmem:[%s5 + $0x988] sm:$0xff]
    %v1697 = vld [vmem:[%s5 + $0x990] sm:$0xff]
    %v1698 = vld [vmem:[%s5 + $0x998] sm:$0xff]
    %v1699 = vld [vmem:[%s5 + $0x9a0] sm:$0xff]
    %v1700 = vld [vmem:[%s5 + $0x9a8] sm:$0xff]
    %v1701 = vld [vmem:[%s5 + $0x9b0] sm:$0xff]
    %v1702 = vld [vmem:[%s5 + $0x9b8] sm:$0xff]
    %v1703 = vld [vmem:[%s5 + $0x9c0] sm:$0xff]
    %v1704 = vld [vmem:[%s5 + $0x9c8] sm:$0xff]
    %v1705 = vld [vmem:[%s5 + $0x9d0] sm:$0xff]
    %v1706 = vld [vmem:[%s5 + $0x9d8] sm:$0xff]
    %v1707 = vld [vmem:[%s5 + $0x9e0] sm:$0xff]
    %v1708 = vld [vmem:[%s5 + $0x9e8] sm:$0xff]
    %v1709 = vld [vmem:[%s5 + $0x9f0] sm:$0xff]
    %v1710 = vld [vmem:[%s5 + $0x9f8] sm:$0xff]
    %v1711 = vld [vmem:[%s5 + $0xa00] sm:$0xff]
    %v1712 = vld [vmem:[%s5 + $0xa08] sm:$0xff]
    %v1713 = vld [vmem:[%s5 + $0xa10] sm:$0xff]
    %v1714 = vld [vmem:[%s5 + $0xa18] sm:$0xff]
    %v1715 = vld [vmem:[%s5 + $0xa20] sm:$0xff]
    %v1716 = vld [vmem:[%s5 + $0xa28] sm:$0xff]
    %v1717 = vld [vmem:[%s5 + $0xa30] sm:$0xff]
    %v1718 = vld [vmem:[%s5 + $0xa38] sm:$0xff]
    %v1719 = vld [vmem:[%s5 + $0xa40] sm:$0xff]
    %v1720 = vld [vmem:[%s5 + $0xa48] sm:$0xff]
    %v1721 = vld [vmem:[%s5 + $0xa50] sm:$0xff]
    %v1722 = vld [vmem:[%s5 + $0xa58] sm:$0xff]
    %v1723 = vld [vmem:[%s5 + $0xa60] sm:$0xff]
    %v1724 = vld [vmem:[%s5 + $0xa68] sm:$0xff]
    %v1725 = vld [vmem:[%s5 + $0xa70] sm:$0xff]
    %v1726 = vld [vmem:[%s5 + $0xa78] sm:$0xff]
    %v1727 = vld [vmem:[%s5 + $0xa80] sm:$0xff]
    %v1728 = vld [vmem:[%s5 + $0xa88] sm:$0xff]
    %v1729 = vld [vmem:[%s5 + $0xa90] sm:$0xff]
    %v1730 = vld [vmem:[%s5 + $0xa98] sm:$0xff]
    %v1731 = vld [vmem:[%s5 + $0xaa0] sm:$0xff]
    %v1732 = vld [vmem:[%s5 + $0xaa8] sm:$0xff]
    %v1733 = vld [vmem:[%s5 + $0xab0] sm:$0xff]
    %v1734 = vld [vmem:[%s5 + $0xab8] sm:$0xff]
    %v1735 = vld [vmem:[%s5 + $0xac0] sm:$0xff]
    %v1736 = vld [vmem:[%s5 + $0xac8] sm:$0xff]
    %v1737 = vld [vmem:[%s5 + $0xad0] sm:$0xff]
    %v1738 = vld [vmem:[%s5 + $0xad8] sm:$0xff]
    %v1739 = vld [vmem:[%s5 + $0xae0] sm:$0xff]
    %v1740 = vld [vmem:[%s5 + $0xae8] sm:$0xff]
    %v1741 = vld [vmem:[%s5 + $0xaf0] sm:$0xff]
    %v1742 = vld [vmem:[%s5 + $0xaf8] sm:$0xff]
    %v1743 = vld [vmem:[%s5 + $0xb00] sm:$0xff]
    %v1744 = vld [vmem:[%s5 + $0xb08] sm:$0xff]
    %v1745 = vld [vmem:[%s5 + $0xb10] sm:$0xff]
    %v1746 = vld [vmem:[%s5 + $0xb18] sm:$0xff]
    %v1747 = vld [vmem:[%s5 + $0xb20] sm:$0xff]
    %v1748 = vld [vmem:[%s5 + $0xb28] sm:$0xff]
    %v1749 = vld [vmem:[%s5 + $0xb30] sm:$0xff]
    %v1750 = vld [vmem:[%s5 + $0xb38] sm:$0xff]
    %v1751 = vld [vmem:[%s5 + $0xb40] sm:$0xff]
    %v1752 = vld [vmem:[%s5 + $0xb48] sm:$0xff]
    %v1753 = vld [vmem:[%s5 + $0xb50] sm:$0xff]
    %v1754 = vld [vmem:[%s5 + $0xb58] sm:$0xff]
    %v1755 = vld [vmem:[%s5 + $0xb60] sm:$0xff]
    %v1756 = vld [vmem:[%s5 + $0xb68] sm:$0xff]
    %v1757 = vld [vmem:[%s5 + $0xb70] sm:$0xff]
    %v1758 = vld [vmem:[%s5 + $0xb78] sm:$0xff]
    %v1759 = vld [vmem:[%s5 + $0xb80] sm:$0xff]
    %v1760 = vld [vmem:[%s5 + $0xb88] sm:$0xff]
    %v1761 = vld [vmem:[%s5 + $0xb90] sm:$0xff]
    %v1762 = vld [vmem:[%s5 + $0xb98] sm:$0xff]
    %v1763 = vld [vmem:[%s5 + $0xba0] sm:$0xff]
    %v1764 = vld [vmem:[%s5 + $0xba8] sm:$0xff]
    %v1765 = vld [vmem:[%s5 + $0xbb0] sm:$0xff]
    %v1766 = vld [vmem:[%s5 + $0xbb8] sm:$0xff]
    %v1767 = vld [vmem:[%s5 + $0xbc0] sm:$0xff]
    %v1768 = vld [vmem:[%s5 + $0xbc8] sm:$0xff]
    %v1769 = vld [vmem:[%s5 + $0xbd0] sm:$0xff]
    %v1770 = vld [vmem:[%s5 + $0xbd8] sm:$0xff]
    %v1771 = vld [vmem:[%s5 + $0xbe0] sm:$0xff]
    %v1772 = vld [vmem:[%s5 + $0xbe8] sm:$0xff]
    %v1773 = vld [vmem:[%s5 + $0xbf0] sm:$0xff]
    %v1774 = vld [vmem:[%s5 + $0xbf8] sm:$0xff]
    %v1775 = vld [vmem:[%s5 + $0xc00] sm:$0xff]
    %v1776 = vld [vmem:[%s5 + $0xc08] sm:$0xff]
    %v1777 = vld [vmem:[%s5 + $0xc10] sm:$0xff]
    %v1778 = vld [vmem:[%s5 + $0xc18] sm:$0xff]
    %v1779 = vld [vmem:[%s5 + $0xc20] sm:$0xff]
    %v1780 = vld [vmem:[%s5 + $0xc28] sm:$0xff]
    %v1781 = vld [vmem:[%s5 + $0xc30] sm:$0xff]
    %v1782 = vld [vmem:[%s5 + $0xc38] sm:$0xff]
    %v1783 = vld [vmem:[%s5 + $0xc40] sm:$0xff]
    %v1784 = vld [vmem:[%s5 + $0xc48] sm:$0xff]
    %v1785 = vld [vmem:[%s5 + $0xc50] sm:$0xff]
    %v1786 = vld [vmem:[%s5 + $0xc58] sm:$0xff]
    %v1787 = vld [vmem:[%s5 + $0xc60] sm:$0xff]
    %v1788 = vld [vmem:[%s5 + $0xc68] sm:$0xff]
    %v1789 = vld [vmem:[%s5 + $0xc70] sm:$0xff]
    %v1790 = vld [vmem:[%s5 + $0xc78] sm:$0xff]
    %v1791 = vld [vmem:[%s5 + $0xc80] sm:$0xff]
    %v1792 = vld [vmem:[%s5 + $0xc88] sm:$0xff]
    %v1793 = vld [vmem:[%s5 + $0xc90] sm:$0xff]
    %v1794 = vld [vmem:[%s5 + $0xc98] sm:$0xff]
    %v1795 = vld [vmem:[%s5 + $0xca0] sm:$0xff]
    %v1796 = vld [vmem:[%s5 + $0xca8] sm:$0xff]
    %v1797 = vld [vmem:[%s5 + $0xcb0] sm:$0xff]
    %v1798 = vld [vmem:[%s5 + $0xcb8] sm:$0xff]
    %s1799 = scalar_lea.vmem %s2, 2
    %v1800 = vld [vmem:[%s1799] ss:$4 sm:$0x7]
    %v1802 = vlaneseq
    %v1803 = vshrl.u32 %v1802, 7
    %v1804 = vsub.s32 0, %v1803
    %v1805 = vrot.slane %v1800, %v1804
    %v1806 = vlaneseq
    %v1807 = vshrl.u32 %v1806, 7
    %v1808 = vsub.s32 1, %v1807
    %v1809 = vrot.slane %v1800, %v1808
    %v1810 = vlaneseq
    %v1811 = vshrl.u32 %v1810, 7
    %v1812 = vsub.s32 2, %v1811
    %v1813 = vrot.slane %v1800, %v1812
    %vm1817 = vcmask 523264
    %v1819 = vsel %vm1817, %v1390, 0
    %1821 = vmatprep.subr.mxu0 %v1392
    %1822 = vmatpush1.msra.mxu0 %v1391
    %1823 = vmatprep.subr.mxu0 %v1395
    %1824 = vmatpush1.msra.mxu0 %v1394
    %1825 = vmatprep.subr.mxu0 %v1398
    %1826 = vmatpush1.msra.mxu0 %v1397
    %1827 = vmatprep.subr.mxu0 %v1401
    %1828 = vmatpush1.msra.mxu0 %v1400
    %1829 = vmatprep.subr.mxu0 %v1404
    %1830 = vmatpush1.msra.mxu0 %v1403
    %1831 = vmatprep.subr.mxu0 %v1407
    %1832 = vmatpush1.msra.mxu0 %v1406
    %1833 = vmatprep.subr.mxu0 %v1410
    %1834 = vmatpush1.msra.mxu0 %v1409
    %1835 = vmatprep.subr.mxu0 %v1413
    %1836 = vmatpush1.msra.mxu0 %v1412
    %1837 = vmatprep.subr.mxu0 %v1416
    %1838 = vmatpush1.msra.mxu0 %v1415
    %1839 = vmatprep.subr.mxu0 %v1419
    %1840 = vmatpush1.msra.mxu0 %v1418
    %1841 = vmatprep.subr.mxu0 %v1422
    %1842 = vmatpush1.msra.mxu0 %v1421
    %1843 = vmatprep.subr.mxu0 %v1425
    %1844 = vmatpush1.msra.mxu0 %v1424
    %1845 = vmatprep.subr.mxu0 %v1428
    %1846 = vmatpush1.msra.mxu0 %v1427
    %1847 = vmatprep.subr.mxu0 %v1431
    %1848 = vmatpush1.msra.mxu0 %v1430
    %1849 = vmatprep.subr.mxu0 %v1434
    %1850 = vmatpush1.msra.mxu0 %v1433
    %1851 = vmatprep.subr.mxu0 %v1437
    %1852 = vmatpush1.msra.mxu0 %v1436
    %1853 = vmatprep.subr.mxu0 %v1440
    %1854 = vmatpush1.msra.mxu0 %v1439
    %1855 = vmatprep.subr.mxu0 %v1443
    %1856 = vmatpush1.msra.mxu0 %v1442
    %1857 = vmatprep.subr.mxu0 %v1446
    %1858 = vmatpush1.msra.mxu0 %v1445
    %1859 = vmatprep.subr.mxu0 %v1449
    %1860 = vmatpush1.msra.mxu0 %v1448
    %1861 = vmatprep.subr.mxu0 %v1452
    %1862 = vmatpush1.msra.mxu0 %v1451
    %1863 = vmatprep.subr.mxu0 %v1455
    %1864 = vmatpush1.msra.mxu0 %v1454
    %1865 = vmatprep.subr.mxu0 %v1458
    %1866 = vmatpush1.msra.mxu0 %v1457
    %1867 = vmatprep.subr.mxu0 %v1461
    %1868 = vmatpush1.msra.mxu0 %v1460
    %1869 = vmatprep.subr.mxu0 %v1464
    %1870 = vmatpush1.msra.mxu0 %v1463
    %1871 = vmatprep.subr.mxu0 %v1467
    %1872 = vmatpush1.msra.mxu0 %v1466
    %1873 = vmatprep.subr.mxu0 %v1470
    %1874 = vmatpush1.msra.mxu0 %v1469
    %1875 = vmatprep.subr.mxu0 %v1473
    %1876 = vmatpush1.msra.mxu0 %v1472
    %1877 = vmatprep.subr.mxu0 %v1476
    %1878 = vmatpush1.msra.mxu0 %v1475
    %1879 = vmatprep.subr.mxu0 %v1479
    %1880 = vmatpush1.msra.mxu0 %v1478
    %1881 = vmatprep.subr.mxu0 %v1482
    %1882 = vmatpush1.msra.mxu0 %v1481
    %1883 = vmatprep.subr.mxu0 %v1485
    %1884 = vmatpush1.msra.mxu0 %v1484
    %1885 = vmatprep.mubr.f32.mxu0 %v1383
    %1886 = vmatmul.mubr.f32.gmra.mrb[0].mxu0 %v1382
    %v1887 = vpop.f32.mrb[0].mxu0
    %v1888 = vadd.f32 %v1805, %v1887
    %v1889 = vpop.f32.mrb[0].mxu0
    %v1890 = vadd.f32 %v1809, %v1889
    %1891 = vdwg.mxu0
    %1892 = vmatprep.subr.mxu0 %v1488
    %1893 = vmatpush1.msra.mxu0 %v1487
    %1894 = vmatprep.subr.mxu0 %v1491
    %1895 = vmatpush1.msra.mxu0 %v1490
    %1896 = vmatprep.subr.mxu0 %v1494
    %1897 = vmatpush1.msra.mxu0 %v1493
    %1898 = vmatprep.subr.mxu0 %v1497
    %1899 = vmatpush1.msra.mxu0 %v1496
    %1900 = vmatprep.subr.mxu0 %v1500
    %1901 = vmatpush1.msra.mxu0 %v1499
    %1902 = vmatprep.subr.mxu0 %v1503
    %1903 = vmatpush1.msra.mxu0 %v1502
    %1904 = vmatprep.subr.mxu0 %v1506
    %1905 = vmatpush1.msra.mxu0 %v1505
    %1906 = vmatprep.subr.mxu0 %v1509
    %1907 = vmatpush1.msra.mxu0 %v1508
    %1908 = vmatprep.subr.mxu0 %v1512
    %1909 = vmatpush1.msra.mxu0 %v1511
    %1910 = vmatprep.subr.mxu0 %v1515
    %1911 = vmatpush1.msra.mxu0 %v1514
    %1912 = vmatprep.subr.mxu0 %v1518
    %1913 = vmatpush1.msra.mxu0 %v1517
    %1914 = vmatprep.subr.mxu0 %v1521
    %1915 = vmatpush1.msra.mxu0 %v1520
    %1916 = vmatprep.subr.mxu0 %v1524
    %1917 = vmatpush1.msra.mxu0 %v1523
    %1918 = vmatprep.subr.mxu0 %v1527
    %1919 = vmatpush1.msra.mxu0 %v1526
    %1920 = vmatprep.subr.mxu0 %v1530
    %1921 = vmatpush1.msra.mxu0 %v1529
    %1922 = vmatprep.subr.mxu0 %v1533
    %1923 = vmatpush1.msra.mxu0 %v1532
    %1924 = vmatprep.subr.mxu0 %v1536
    %1925 = vmatpush1.msra.mxu0 %v1535
    %1926 = vmatprep.subr.mxu0 %v1539
    %1927 = vmatpush1.msra.mxu0 %v1538
    %1928 = vmatprep.subr.mxu0 %v1542
    %1929 = vmatpush1.msra.mxu0 %v1541
    %1930 = vmatprep.subr.mxu0 %v1545
    %1931 = vmatpush1.msra.mxu0 %v1544
    %1932 = vmatprep.subr.mxu0 %v1548
    %1933 = vmatpush1.msra.mxu0 %v1547
    %1934 = vmatprep.subr.mxu0 %v1551
    %1935 = vmatpush1.msra.mxu0 %v1550
    %1936 = vmatprep.subr.mxu0 %v1554
    %1937 = vmatpush1.msra.mxu0 %v1553
    %1938 = vmatprep.subr.mxu0 %v1557
    %1939 = vmatpush1.msra.mxu0 %v1556
    %1940 = vmatprep.subr.mxu0 %v1560
    %1941 = vmatpush1.msra.mxu0 %v1559
    %1942 = vmatprep.subr.mxu0 %v1563
    %1943 = vmatpush1.msra.mxu0 %v1562
    %1944 = vmatprep.subr.mxu0 %v1566
    %1945 = vmatpush1.msra.mxu0 %v1565
    %1946 = vmatprep.subr.mxu0 %v1569
    %1947 = vmatpush1.msra.mxu0 %v1568
    %1948 = vmatprep.subr.mxu0 %v1572
    %1949 = vmatpush1.msra.mxu0 %v1571
    %1950 = vmatprep.subr.mxu0 %v1575
    %1951 = vmatpush1.msra.mxu0 %v1574
    %1952 = vmatprep.subr.mxu0 %v1578
    %1953 = vmatpush1.msra.mxu0 %v1577
    %1954 = vmatprep.subr.mxu0 %v1581
    %1955 = vmatpush1.msra.mxu0 %v1580
    %1956 = vmatprep.mubr.f32.mxu0 %v1385
    %1957 = vmatmul.mubr.f32.gmra.mrb[0].mxu0 %v1384
    %v1958 = vpop.f32.mrb[0].mxu0
    %v1959 = vadd.f32 %v1888, %v1958
    %v1960 = vpop.f32.mrb[0].mxu0
    %v1961 = vadd.f32 %v1890, %v1960
    %1962 = vdwg.mxu0
    %1963 = vmatprep.subr.mxu0 %v1584
    %1964 = vmatpush1.msra.mxu0 %v1583
    %1965 = vmatprep.subr.mxu0 %v1587
    %1966 = vmatpush1.msra.mxu0 %v1586
    %1967 = vmatprep.subr.mxu0 %v1590
    %1968 = vmatpush1.msra.mxu0 %v1589
    %1969 = vmatprep.subr.mxu0 %v1593
    %1970 = vmatpush1.msra.mxu0 %v1592
    %1971 = vmatprep.subr.mxu0 %v1596
    %1972 = vmatpush1.msra.mxu0 %v1595
    %1973 = vmatprep.subr.mxu0 %v1599
    %1974 = vmatpush1.msra.mxu0 %v1598
    %1975 = vmatprep.subr.mxu0 %v1602
    %1976 = vmatpush1.msra.mxu0 %v1601
    %1977 = vmatprep.subr.mxu0 %v1605
    %1978 = vmatpush1.msra.mxu0 %v1604
    %1979 = vmatprep.subr.mxu0 %v1608
    %1980 = vmatpush1.msra.mxu0 %v1607
    %1981 = vmatprep.subr.mxu0 %v1611
    %1982 = vmatpush1.msra.mxu0 %v1610
    %1983 = vmatprep.subr.mxu0 %v1614
    %1984 = vmatpush1.msra.mxu0 %v1613
    %1985 = vmatprep.subr.mxu0 %v1617
    %1986 = vmatpush1.msra.mxu0 %v1616
    %1987 = vmatprep.subr.mxu0 %v1620
    %1988 = vmatpush1.msra.mxu0 %v1619
    %1989 = vmatprep.subr.mxu0 %v1623
    %1990 = vmatpush1.msra.mxu0 %v1622
    %1991 = vmatprep.subr.mxu0 %v1626
    %1992 = vmatpush1.msra.mxu0 %v1625
    %1993 = vmatprep.subr.mxu0 %v1629
    %1994 = vmatpush1.msra.mxu0 %v1628
    %1995 = vmatprep.subr.mxu0 %v1632
    %1996 = vmatpush1.msra.mxu0 %v1631
    %1997 = vmatprep.subr.mxu0 %v1635
    %1998 = vmatpush1.msra.mxu0 %v1634
    %1999 = vmatprep.subr.mxu0 %v1638
    %2000 = vmatpush1.msra.mxu0 %v1637
    %2001 = vmatprep.subr.mxu0 %v1641
    %2002 = vmatpush1.msra.mxu0 %v1640
    %2003 = vmatprep.subr.mxu0 %v1644
    %2004 = vmatpush1.msra.mxu0 %v1643
    %2005 = vmatprep.subr.mxu0 %v1647
    %2006 = vmatpush1.msra.mxu0 %v1646
    %2007 = vmatprep.subr.mxu0 %v1650
    %2008 = vmatpush1.msra.mxu0 %v1649
    %2009 = vmatprep.subr.mxu0 %v1653
    %2010 = vmatpush1.msra.mxu0 %v1652
    %2011 = vmatprep.subr.mxu0 %v1656
    %2012 = vmatpush1.msra.mxu0 %v1655
    %2013 = vmatprep.subr.mxu0 %v1659
    %2014 = vmatpush1.msra.mxu0 %v1658
    %2015 = vmatprep.subr.mxu0 %v1662
    %2016 = vmatpush1.msra.mxu0 %v1661
    %2017 = vmatprep.subr.mxu0 %v1665
    %2018 = vmatpush1.msra.mxu0 %v1664
    %2019 = vmatprep.subr.mxu0 %v1668
    %2020 = vmatpush1.msra.mxu0 %v1667
    %2021 = vmatprep.subr.mxu0 %v1671
    %2022 = vmatpush1.msra.mxu0 %v1670
    %2023 = vmatprep.subr.mxu0 %v1674
    %2024 = vmatpush1.msra.mxu0 %v1673
    %2025 = vmatprep.subr.mxu0 %v1677
    %2026 = vmatpush1.msra.mxu0 %v1676
    %2027 = vmatprep.mubr.f32.mxu0 %v1387
    %2028 = vmatmul.mubr.f32.gmra.mrb[0].mxu0 %v1386
    %v2029 = vpop.f32.mrb[0].mxu0
    %v2030 = vadd.f32 %v1959, %v2029
    %v2031 = vpop.f32.mrb[0].mxu0
    %v2032 = vadd.f32 %v1961, %v2031
    %2033 = vdwg.mxu0
    %2034 = vmatprep.subr.mxu0 %v1680
    %2035 = vmatpush1.msra.mxu0 %v1679
    %2036 = vmatprep.subr.mxu0 %v1683
    %2037 = vmatpush1.msra.mxu0 %v1682
    %2038 = vmatprep.subr.mxu0 %v1686
    %2039 = vmatpush1.msra.mxu0 %v1685
    %2040 = vmatprep.subr.mxu0 %v1689
    %2041 = vmatpush1.msra.mxu0 %v1688
    %2042 = vmatprep.subr.mxu0 %v1692
    %2043 = vmatpush1.msra.mxu0 %v1691
    %2044 = vmatprep.subr.mxu0 %v1695
    %2045 = vmatpush1.msra.mxu0 %v1694
    %2046 = vmatprep.subr.mxu0 %v1698
    %2047 = vmatpush1.msra.mxu0 %v1697
    %2048 = vmatprep.subr.mxu0 %v1701
    %2049 = vmatpush1.msra.mxu0 %v1700
    %2050 = vmatprep.subr.mxu0 %v1704
    %2051 = vmatpush1.msra.mxu0 %v1703
    %2052 = vmatprep.subr.mxu0 %v1707
    %2053 = vmatpush1.msra.mxu0 %v1706
    %2054 = vmatprep.subr.mxu0 %v1710
    %2055 = vmatpush1.msra.mxu0 %v1709
    %2056 = vmatprep.subr.mxu0 %v1713
    %2057 = vmatpush1.msra.mxu0 %v1712
    %2058 = vmatprep.subr.mxu0 %v1716
    %2059 = vmatpush1.msra.mxu0 %v1715
    %2060 = vmatprep.subr.mxu0 %v1719
    %2061 = vmatpush1.msra.mxu0 %v1718
    %2062 = vmatprep.subr.mxu0 %v1722
    %2063 = vmatpush1.msra.mxu0 %v1721
    %2064 = vmatprep.subr.mxu0 %v1725
    %2065 = vmatpush1.msra.mxu0 %v1724
    %2066 = vmatprep.subr.mxu0 %v1728
    %2067 = vmatpush1.msra.mxu0 %v1727
    %2068 = vmatprep.subr.mxu0 %v1731
    %2069 = vmatpush1.msra.mxu0 %v1730
    %2070 = vmatprep.subr.mxu0 %v1734
    %2071 = vmatpush1.msra.mxu0 %v1733
    %2072 = vmatprep.subr.mxu0 %v1737
    %2073 = vmatpush1.msra.mxu0 %v1736
    %2074 = vmatprep.subr.mxu0 %v1740
    %2075 = vmatpush1.msra.mxu0 %v1739
    %2076 = vmatprep.subr.mxu0 %v1743
    %2077 = vmatpush1.msra.mxu0 %v1742
    %2078 = vmatprep.subr.mxu0 %v1746
    %2079 = vmatpush1.msra.mxu0 %v1745
    %2080 = vmatprep.subr.mxu0 %v1749
    %2081 = vmatpush1.msra.mxu0 %v1748
    %2082 = vmatprep.subr.mxu0 %v1752
    %2083 = vmatpush1.msra.mxu0 %v1751
    %2084 = vmatprep.subr.mxu0 %v1755
    %2085 = vmatpush1.msra.mxu0 %v1754
    %2086 = vmatprep.subr.mxu0 %v1758
    %2087 = vmatpush1.msra.mxu0 %v1757
    %2088 = vmatprep.subr.mxu0 %v1761
    %2089 = vmatpush1.msra.mxu0 %v1760
    %2090 = vmatprep.subr.mxu0 %v1764
    %2091 = vmatpush1.msra.mxu0 %v1763
    %2092 = vmatprep.subr.mxu0 %v1767
    %2093 = vmatpush1.msra.mxu0 %v1766
    %2094 = vmatprep.subr.mxu0 %v1770
    %2095 = vmatpush1.msra.mxu0 %v1769
    %2096 = vmatprep.subr.mxu0 %v1773
    %2097 = vmatpush1.msra.mxu0 %v1772
    %2098 = vmatprep.mubr.f32.mxu0 %v1389
    %2099 = vmatmul.mubr.f32.gmra.mrb[0].mxu0 %v1388
    %v2100 = vpop.f32.mrb[0].mxu0
    %v2101 = vadd.f32 %v2030, %v2100
    %v2102 = vpop.f32.mrb[0].mxu0
    %v2103 = vadd.f32 %v2032, %v2102
    %2104 = vdwg.mxu0
    %2105 = vmatprep.subr.mxu0 %v1776
    %2106 = vmatpush1.msra.mxu0 %v1775
    %2107 = vmatprep.subr.mxu0 %v1779
    %2108 = vmatpush1.msra.mxu0 %v1778
    %2109 = vmatprep.subr.mxu0 %v1782
    %2110 = vmatpush1.msra.mxu0 %v1781
    %2111 = vmatprep.subr.mxu0 %v1785
    %2112 = vmatpush1.msra.mxu0 %v1784
    %2113 = vmatprep.subr.mxu0 %v1788
    %2114 = vmatpush1.msra.mxu0 %v1787
    %2115 = vmatprep.subr.mxu0 %v1791
    %2116 = vmatpush1.msra.mxu0 %v1790
    %2117 = vmatprep.subr.mxu0 %v1794
    %2118 = vmatpush1.msra.mxu0 %v1793
    %2119 = vmatprep.subr.mxu0 %v1797
    %2120 = vmatpush1.msra.mxu0 %v1796
    %2121 = vmatprep.subr.mxu0 0.0
    %2122 = vmatpush1.msra.mxu0 0.0
    %2123 = vmatprep.subr.mxu0 0.0
    %2124 = vmatpush1.msra.mxu0 0.0
    %2125 = vmatprep.subr.mxu0 0.0
    %2126 = vmatpush1.msra.mxu0 0.0
    %2127 = vmatprep.subr.mxu0 0.0
    %2128 = vmatpush1.msra.mxu0 0.0
    %2129 = vmatprep.subr.mxu0 0.0
    %2130 = vmatpush1.msra.mxu0 0.0
    %2131 = vmatprep.subr.mxu0 0.0
    %2132 = vmatpush1.msra.mxu0 0.0
    %2133 = vmatprep.subr.mxu0 0.0
    %2134 = vmatpush1.msra.mxu0 0.0
    %2135 = vmatprep.subr.mxu0 0.0
    %2136 = vmatpush1.msra.mxu0 0.0
    %2137 = vmatprep.subr.mxu0 0.0
    %2138 = vmatpush1.msra.mxu0 0.0
    %2139 = vmatprep.subr.mxu0 0.0
    %2140 = vmatpush1.msra.mxu0 0.0
    %2141 = vmatprep.subr.mxu0 0.0
    %2142 = vmatpush1.msra.mxu0 0.0
    %2143 = vmatprep.subr.mxu0 0.0
    %2144 = vmatpush1.msra.mxu0 0.0
    %2145 = vmatprep.subr.mxu0 0.0
    %2146 = vmatpush1.msra.mxu0 0.0
    %2147 = vmatprep.subr.mxu0 0.0
    %2148 = vmatpush1.msra.mxu0 0.0
    %2149 = vmatprep.subr.mxu0 0.0
    %2150 = vmatpush1.msra.mxu0 0.0
    %2151 = vmatprep.subr.mxu0 0.0
    %2152 = vmatpush1.msra.mxu0 0.0
    %2153 = vmatprep.subr.mxu0 0.0
    %2154 = vmatpush1.msra.mxu0 0.0
    %2155 = vmatprep.subr.mxu0 0.0
    %2156 = vmatpush1.msra.mxu0 0.0
    %2157 = vmatprep.subr.mxu0 0.0
    %2158 = vmatpush1.msra.mxu0 0.0
    %2159 = vmatprep.subr.mxu0 0.0
    %2160 = vmatpush1.msra.mxu0 0.0
    %2161 = vmatprep.subr.mxu0 0.0
    %2162 = vmatpush1.msra.mxu0 0.0
    %2163 = vmatprep.subr.mxu0 0.0
    %2164 = vmatpush1.msra.mxu0 0.0
    %2165 = vmatprep.subr.mxu0 0.0
    %2166 = vmatpush1.msra.mxu0 0.0
    %2167 = vmatprep.subr.mxu0 0.0
    %2168 = vmatpush1.msra.mxu0 0.0
    %2169 = vmatprep.mubr.f32.mxu0 0.0
    %2170 = vmatmul.mubr.f32.gmra.mrb[0].mxu0 %v1819
    %v2171 = vpop.f32.mrb[0].mxu0
    %v2172 = vadd.f32 %v2101, %v2171
    %v2173 = vpop.f32.mrb[0].mxu0
    %v2174 = vadd.f32 %v2103, %v2173
    %2175 = vdwg.mxu0
    %2176 = vmatprep.subr.mxu0 0.0
    %2177 = vmatpush1.msra.mxu0 %v1393
    %2178 = vmatprep.subr.mxu0 0.0
    %2179 = vmatpush1.msra.mxu0 %v1396
    %2180 = vmatprep.subr.mxu0 0.0
    %2181 = vmatpush1.msra.mxu0 %v1399
    %2182 = vmatprep.subr.mxu0 0.0
    %2183 = vmatpush1.msra.mxu0 %v1402
    %2184 = vmatprep.subr.mxu0 0.0
    %2185 = vmatpush1.msra.mxu0 %v1405
    %2186 = vmatprep.subr.mxu0 0.0
    %2187 = vmatpush1.msra.mxu0 %v1408
    %2188 = vmatprep.subr.mxu0 0.0
    %2189 = vmatpush1.msra.mxu0 %v1411
    %2190 = vmatprep.subr.mxu0 0.0
    %2191 = vmatpush1.msra.mxu0 %v1414
    %2192 = vmatprep.subr.mxu0 0.0
    %2193 = vmatpush1.msra.mxu0 %v1417
    %2194 = vmatprep.subr.mxu0 0.0
    %2195 = vmatpush1.msra.mxu0 %v1420
    %2196 = vmatprep.subr.mxu0 0.0
    %2197 = vmatpush1.msra.mxu0 %v1423
    %2198 = vmatprep.subr.mxu0 0.0
    %2199 = vmatpush1.msra.mxu0 %v1426
    %2200 = vmatprep.subr.mxu0 0.0
    %2201 = vmatpush1.msra.mxu0 %v1429
    %2202 = vmatprep.subr.mxu0 0.0
    %2203 = vmatpush1.msra.mxu0 %v1432
    %2204 = vmatprep.subr.mxu0 0.0
    %2205 = vmatpush1.msra.mxu0 %v1435
    %2206 = vmatprep.subr.mxu0 0.0
    %2207 = vmatpush1.msra.mxu0 %v1438
    %2208 = vmatprep.subr.mxu0 0.0
    %2209 = vmatpush1.msra.mxu0 %v1441
    %2210 = vmatprep.subr.mxu0 0.0
    %2211 = vmatpush1.msra.mxu0 %v1444
    %2212 = vmatprep.subr.mxu0 0.0
    %2213 = vmatpush1.msra.mxu0 %v1447
    %2214 = vmatprep.subr.mxu0 0.0
    %2215 = vmatpush1.msra.mxu0 %v1450
    %2216 = vmatprep.subr.mxu0 0.0
    %2217 = vmatpush1.msra.mxu0 %v1453
    %2218 = vmatprep.subr.mxu0 0.0
    %2219 = vmatpush1.msra.mxu0 %v1456
    %2220 = vmatprep.subr.mxu0 0.0
    %2221 = vmatpush1.msra.mxu0 %v1459
    %2222 = vmatprep.subr.mxu0 0.0
    %2223 = vmatpush1.msra.mxu0 %v1462
    %2224 = vmatprep.subr.mxu0 0.0
    %2225 = vmatpush1.msra.mxu0 %v1465
    %2226 = vmatprep.subr.mxu0 0.0
    %2227 = vmatpush1.msra.mxu0 %v1468
    %2228 = vmatprep.subr.mxu0 0.0
    %2229 = vmatpush1.msra.mxu0 %v1471
    %2230 = vmatprep.subr.mxu0 0.0
    %2231 = vmatpush1.msra.mxu0 %v1474
    %2232 = vmatprep.subr.mxu0 0.0
    %2233 = vmatpush1.msra.mxu0 %v1477
    %2234 = vmatprep.subr.mxu0 0.0
    %2235 = vmatpush1.msra.mxu0 %v1480
    %2236 = vmatprep.subr.mxu0 0.0
    %2237 = vmatpush1.msra.mxu0 %v1483
    %2238 = vmatprep.subr.mxu0 0.0
    %2239 = vmatpush1.msra.mxu0 %v1486
    %2240 = vmatprep.mubr.f32.mxu0 %v1383
    %2241 = vmatmul.mubr.f32.gmra.mrb[0].mxu0 %v1382
    %v2242 = vpop.f32.mrb[0].mxu0
    %v2243 = vadd.f32 %v1813, %v2242
    %v2244 = vpop.f32.mrb[0].mxu0
    %2245 = vdwg.mxu0
    %2246 = vmatprep.subr.mxu0 0.0
    %2247 = vmatpush1.msra.mxu0 %v1489
    %2248 = vmatprep.subr.mxu0 0.0
    %2249 = vmatpush1.msra.mxu0 %v1492
    %2250 = vmatprep.subr.mxu0 0.0
    %2251 = vmatpush1.msra.mxu0 %v1495
    %2252 = vmatprep.subr.mxu0 0.0
    %2253 = vmatpush1.msra.mxu0 %v1498
    %2254 = vmatprep.subr.mxu0 0.0
    %2255 = vmatpush1.msra.mxu0 %v1501
    %2256 = vmatprep.subr.mxu0 0.0
    %2257 = vmatpush1.msra.mxu0 %v1504
    %2258 = vmatprep.subr.mxu0 0.0
    %2259 = vmatpush1.msra.mxu0 %v1507
    %2260 = vmatprep.subr.mxu0 0.0
    %2261 = vmatpush1.msra.mxu0 %v1510
    %2262 = vmatprep.subr.mxu0 0.0
    %2263 = vmatpush1.msra.mxu0 %v1513
    %2264 = vmatprep.subr.mxu0 0.0
    %2265 = vmatpush1.msra.mxu0 %v1516
    %2266 = vmatprep.subr.mxu0 0.0
    %2267 = vmatpush1.msra.mxu0 %v1519
    %2268 = vmatprep.subr.mxu0 0.0
    %2269 = vmatpush1.msra.mxu0 %v1522
    %2270 = vmatprep.subr.mxu0 0.0
    %2271 = vmatpush1.msra.mxu0 %v1525
    %2272 = vmatprep.subr.mxu0 0.0
    %2273 = vmatpush1.msra.mxu0 %v1528
    %2274 = vmatprep.subr.mxu0 0.0
    %2275 = vmatpush1.msra.mxu0 %v1531
    %2276 = vmatprep.subr.mxu0 0.0
    %2277 = vmatpush1.msra.mxu0 %v1534
    %2278 = vmatprep.subr.mxu0 0.0
    %2279 = vmatpush1.msra.mxu0 %v1537
    %2280 = vmatprep.subr.mxu0 0.0
    %2281 = vmatpush1.msra.mxu0 %v1540
    %2282 = vmatprep.subr.mxu0 0.0
    %2283 = vmatpush1.msra.mxu0 %v1543
    %2284 = vmatprep.subr.mxu0 0.0
    %2285 = vmatpush1.msra.mxu0 %v1546
    %2286 = vmatprep.subr.mxu0 0.0
    %2287 = vmatpush1.msra.mxu0 %v1549
    %2288 = vmatprep.subr.mxu0 0.0
    %2289 = vmatpush1.msra.mxu0 %v1552
    %2290 = vmatprep.subr.mxu0 0.0
    %2291 = vmatpush1.msra.mxu0 %v1555
    %2292 = vmatprep.subr.mxu0 0.0
    %2293 = vmatpush1.msra.mxu0 %v1558
    %2294 = vmatprep.subr.mxu0 0.0
    %2295 = vmatpush1.msra.mxu0 %v1561
    %2296 = vmatprep.subr.mxu0 0.0
    %2297 = vmatpush1.msra.mxu0 %v1564
    %2298 = vmatprep.subr.mxu0 0.0
    %2299 = vmatpush1.msra.mxu0 %v1567
    %2300 = vmatprep.subr.mxu0 0.0
    %2301 = vmatpush1.msra.mxu0 %v1570
    %2302 = vmatprep.subr.mxu0 0.0
    %2303 = vmatpush1.msra.mxu0 %v1573
    %2304 = vmatprep.subr.mxu0 0.0
    %2305 = vmatpush1.msra.mxu0 %v1576
    %2306 = vmatprep.subr.mxu0 0.0
    %2307 = vmatpush1.msra.mxu0 %v1579
    %2308 = vmatprep.subr.mxu0 0.0
    %2309 = vmatpush1.msra.mxu0 %v1582
    %2310 = vmatprep.mubr.f32.mxu0 %v1385
    %2311 = vmatmul.mubr.f32.gmra.mrb[0].mxu0 %v1384
    %v2312 = vpop.f32.mrb[0].mxu0
    %v2313 = vadd.f32 %v2243, %v2312
    %v2314 = vpop.f32.mrb[0].mxu0
    %2315 = vdwg.mxu0
    %2316 = vmatprep.subr.mxu0 0.0
    %2317 = vmatpush1.msra.mxu0 %v1585
    %2318 = vmatprep.subr.mxu0 0.0
    %2319 = vmatpush1.msra.mxu0 %v1588
    %2320 = vmatprep.subr.mxu0 0.0
    %2321 = vmatpush1.msra.mxu0 %v1591
    %2322 = vmatprep.subr.mxu0 0.0
    %2323 = vmatpush1.msra.mxu0 %v1594
    %2324 = vmatprep.subr.mxu0 0.0
    %2325 = vmatpush1.msra.mxu0 %v1597
    %2326 = vmatprep.subr.mxu0 0.0
    %2327 = vmatpush1.msra.mxu0 %v1600
    %2328 = vmatprep.subr.mxu0 0.0
    %2329 = vmatpush1.msra.mxu0 %v1603
    %2330 = vmatprep.subr.mxu0 0.0
    %2331 = vmatpush1.msra.mxu0 %v1606
    %2332 = vmatprep.subr.mxu0 0.0
    %2333 = vmatpush1.msra.mxu0 %v1609
    %2334 = vmatprep.subr.mxu0 0.0
    %2335 = vmatpush1.msra.mxu0 %v1612
    %2336 = vmatprep.subr.mxu0 0.0
    %2337 = vmatpush1.msra.mxu0 %v1615
    %2338 = vmatprep.subr.mxu0 0.0
    %2339 = vmatpush1.msra.mxu0 %v1618
    %2340 = vmatprep.subr.mxu0 0.0
    %2341 = vmatpush1.msra.mxu0 %v1621
    %2342 = vmatprep.subr.mxu0 0.0
    %2343 = vmatpush1.msra.mxu0 %v1624
    %2344 = vmatprep.subr.mxu0 0.0
    %2345 = vmatpush1.msra.mxu0 %v1627
    %2346 = vmatprep.subr.mxu0 0.0
    %2347 = vmatpush1.msra.mxu0 %v1630
    %2348 = vmatprep.subr.mxu0 0.0
    %2349 = vmatpush1.msra.mxu0 %v1633
    %2350 = vmatprep.subr.mxu0 0.0
    %2351 = vmatpush1.msra.mxu0 %v1636
    %2352 = vmatprep.subr.mxu0 0.0
    %2353 = vmatpush1.msra.mxu0 %v1639
    %2354 = vmatprep.subr.mxu0 0.0
    %2355 = vmatpush1.msra.mxu0 %v1642
    %2356 = vmatprep.subr.mxu0 0.0
    %2357 = vmatpush1.msra.mxu0 %v1645
    %2358 = vmatprep.subr.mxu0 0.0
    %2359 = vmatpush1.msra.mxu0 %v1648
    %2360 = vmatprep.subr.mxu0 0.0
    %2361 = vmatpush1.msra.mxu0 %v1651
    %2362 = vmatprep.subr.mxu0 0.0
    %2363 = vmatpush1.msra.mxu0 %v1654
    %2364 = vmatprep.subr.mxu0 0.0
    %2365 = vmatpush1.msra.mxu0 %v1657
    %2366 = vmatprep.subr.mxu0 0.0
    %2367 = vmatpush1.msra.mxu0 %v1660
    %2368 = vmatprep.subr.mxu0 0.0
    %2369 = vmatpush1.msra.mxu0 %v1663
    %2370 = vmatprep.subr.mxu0 0.0
    %2371 = vmatpush1.msra.mxu0 %v1666
    %2372 = vmatprep.subr.mxu0 0.0
    %2373 = vmatpush1.msra.mxu0 %v1669
    %2374 = vmatprep.subr.mxu0 0.0
    %2375 = vmatpush1.msra.mxu0 %v1672
    %2376 = vmatprep.subr.mxu0 0.0
    %2377 = vmatpush1.msra.mxu0 %v1675
    %2378 = vmatprep.subr.mxu0 0.0
    %2379 = vmatpush1.msra.mxu0 %v1678
    %2380 = vmatprep.mubr.f32.mxu0 %v1387
    %2381 = vmatmul.mubr.f32.gmra.mrb[0].mxu0 %v1386
    %v2382 = vpop.f32.mrb[0].mxu0
    %v2383 = vadd.f32 %v2313, %v2382
    %v2384 = vpop.f32.mrb[0].mxu0
    %2385 = vdwg.mxu0
    %2386 = vmatprep.subr.mxu0 0.0
    %2387 = vmatpush1.msra.mxu0 %v1681
    %2388 = vmatprep.subr.mxu0 0.0
    %2389 = vmatpush1.msra.mxu0 %v1684
    %2390 = vmatprep.subr.mxu0 0.0
    %2391 = vmatpush1.msra.mxu0 %v1687
    %2392 = vmatprep.subr.mxu0 0.0
    %2393 = vmatpush1.msra.mxu0 %v1690
    %2394 = vmatprep.subr.mxu0 0.0
    %2395 = vmatpush1.msra.mxu0 %v1693
    %2396 = vmatprep.subr.mxu0 0.0
    %2397 = vmatpush1.msra.mxu0 %v1696
    %2398 = vmatprep.subr.mxu0 0.0
    %2399 = vmatpush1.msra.mxu0 %v1699
    %2400 = vmatprep.subr.mxu0 0.0
    %2401 = vmatpush1.msra.mxu0 %v1702
    %2402 = vmatprep.subr.mxu0 0.0
    %2403 = vmatpush1.msra.mxu0 %v1705
    %2404 = vmatprep.subr.mxu0 0.0
    %2405 = vmatpush1.msra.mxu0 %v1708
    %2406 = vmatprep.subr.mxu0 0.0
    %2407 = vmatpush1.msra.mxu0 %v1711
    %2408 = vmatprep.subr.mxu0 0.0
    %2409 = vmatpush1.msra.mxu0 %v1714
    %2410 = vmatprep.subr.mxu0 0.0
    %2411 = vmatpush1.msra.mxu0 %v1717
    %2412 = vmatprep.subr.mxu0 0.0
    %2413 = vmatpush1.msra.mxu0 %v1720
    %2414 = vmatprep.subr.mxu0 0.0
    %2415 = vmatpush1.msra.mxu0 %v1723
    %2416 = vmatprep.subr.mxu0 0.0
    %2417 = vmatpush1.msra.mxu0 %v1726
    %2418 = vmatprep.subr.mxu0 0.0
    %2419 = vmatpush1.msra.mxu0 %v1729
    %2420 = vmatprep.subr.mxu0 0.0
    %2421 = vmatpush1.msra.mxu0 %v1732
    %2422 = vmatprep.subr.mxu0 0.0
    %2423 = vmatpush1.msra.mxu0 %v1735
    %2424 = vmatprep.subr.mxu0 0.0
    %2425 = vmatpush1.msra.mxu0 %v1738
    %2426 = vmatprep.subr.mxu0 0.0
    %2427 = vmatpush1.msra.mxu0 %v1741
    %2428 = vmatprep.subr.mxu0 0.0
    %2429 = vmatpush1.msra.mxu0 %v1744
    %2430 = vmatprep.subr.mxu0 0.0
    %2431 = vmatpush1.msra.mxu0 %v1747
    %2432 = vmatprep.subr.mxu0 0.0
    %2433 = vmatpush1.msra.mxu0 %v1750
    %2434 = vmatprep.subr.mxu0 0.0
    %2435 = vmatpush1.msra.mxu0 %v1753
    %2436 = vmatprep.subr.mxu0 0.0
    %2437 = vmatpush1.msra.mxu0 %v1756
    %2438 = vmatprep.subr.mxu0 0.0
    %2439 = vmatpush1.msra.mxu0 %v1759
    %2440 = vmatprep.subr.mxu0 0.0
    %2441 = vmatpush1.msra.mxu0 %v1762
    %2442 = vmatprep.subr.mxu0 0.0
    %2443 = vmatpush1.msra.mxu0 %v1765
    %2444 = vmatprep.subr.mxu0 0.0
    %2445 = vmatpush1.msra.mxu0 %v1768
    %2446 = vmatprep.subr.mxu0 0.0
    %2447 = vmatpush1.msra.mxu0 %v1771
    %2448 = vmatprep.subr.mxu0 0.0
    %2449 = vmatpush1.msra.mxu0 %v1774
    %2450 = vmatprep.mubr.f32.mxu0 %v1389
    %2451 = vmatmul.mubr.f32.gmra.mrb[0].mxu0 %v1388
    %v2452 = vpop.f32.mrb[0].mxu0
    %v2453 = vadd.f32 %v2383, %v2452
    %v2454 = vpop.f32.mrb[0].mxu0
    %2455 = vdwg.mxu0
    %2456 = vmatprep.subr.mxu0 0.0
    %2457 = vmatpush1.msra.mxu0 %v1777
    %2458 = vmatprep.subr.mxu0 0.0
    %2459 = vmatpush1.msra.mxu0 %v1780
    %2460 = vmatprep.subr.mxu0 0.0
    %2461 = vmatpush1.msra.mxu0 %v1783
    %2462 = vmatprep.subr.mxu0 0.0
    %2463 = vmatpush1.msra.mxu0 %v1786
    %2464 = vmatprep.subr.mxu0 0.0
    %2465 = vmatpush1.msra.mxu0 %v1789
    %2466 = vmatprep.subr.mxu0 0.0
    %2467 = vmatpush1.msra.mxu0 %v1792
    %2468 = vmatprep.subr.mxu0 0.0
    %2469 = vmatpush1.msra.mxu0 %v1795
    %2470 = vmatprep.subr.mxu0 0.0
    %2471 = vmatpush1.msra.mxu0 %v1798
    %2472 = vmatprep.subr.mxu0 0.0
    %2473 = vmatpush1.msra.mxu0 0.0
    %2474 = vmatprep.subr.mxu0 0.0
    %2475 = vmatpush1.msra.mxu0 0.0
    %2476 = vmatprep.subr.mxu0 0.0
    %2477 = vmatpush1.msra.mxu0 0.0
    %2478 = vmatprep.subr.mxu0 0.0
    %2479 = vmatpush1.msra.mxu0 0.0
    %2480 = vmatprep.subr.mxu0 0.0
    %2481 = vmatpush1.msra.mxu0 0.0
    %2482 = vmatprep.subr.mxu0 0.0
    %2483 = vmatpush1.msra.mxu0 0.0
    %2484 = vmatprep.subr.mxu0 0.0
    %2485 = vmatpush1.msra.mxu0 0.0
    %2486 = vmatprep.subr.mxu0 0.0
    %2487 = vmatpush1.msra.mxu0 0.0
    %2488 = vmatprep.subr.mxu0 0.0
    %2489 = vmatpush1.msra.mxu0 0.0
    %2490 = vmatprep.subr.mxu0 0.0
    %2491 = vmatpush1.msra.mxu0 0.0
    %2492 = vmatprep.subr.mxu0 0.0
    %2493 = vmatpush1.msra.mxu0 0.0
    %2494 = vmatprep.subr.mxu0 0.0
    %2495 = vmatpush1.msra.mxu0 0.0
    %2496 = vmatprep.subr.mxu0 0.0
    %2497 = vmatpush1.msra.mxu0 0.0
    %2498 = vmatprep.subr.mxu0 0.0
    %2499 = vmatpush1.msra.mxu0 0.0
    %2500 = vmatprep.subr.mxu0 0.0
    %2501 = vmatpush1.msra.mxu0 0.0
    %2502 = vmatprep.subr.mxu0 0.0
    %2503 = vmatpush1.msra.mxu0 0.0
    %2504 = vmatprep.subr.mxu0 0.0
    %2505 = vmatpush1.msra.mxu0 0.0
    %2506 = vmatprep.subr.mxu0 0.0
    %2507 = vmatpush1.msra.mxu0 0.0
    %2508 = vmatprep.subr.mxu0 0.0
    %2509 = vmatpush1.msra.mxu0 0.0
    %2510 = vmatprep.subr.mxu0 0.0
    %2511 = vmatpush1.msra.mxu0 0.0
    %2512 = vmatprep.subr.mxu0 0.0
    %2513 = vmatpush1.msra.mxu0 0.0
    %2514 = vmatprep.subr.mxu0 0.0
    %2515 = vmatpush1.msra.mxu0 0.0
    %2516 = vmatprep.subr.mxu0 0.0
    %2517 = vmatpush1.msra.mxu0 0.0
    %2518 = vmatprep.subr.mxu0 0.0
    %2519 = vmatpush1.msra.mxu0 0.0
    %2520 = vmatprep.mubr.f32.mxu0 0.0
    %2521 = vmatmul.mubr.f32.gmra.mrb[0].mxu0 %v1819
    %v2522 = vpop.f32.mrb[0].mxu0
    %v2523 = vadd.f32 %v2453, %v2522
    %v2524 = vpop.f32.mrb[0].mxu0
    %2525 = vdwg.mxu0
    %v2526 = vmax.f32 %v2172, 0.0
    %v2527 = vmax.f32 %v2174, 0.0
    %v2528 = vmax.f32 %v2523, 0.0
    %v2529 = vld [vmem:[%s6] sm:$0xff]
    %v2530 = vld [vmem:[%s6 + $0x8] sm:$0xff]
    %v2531 = vld [vmem:[%s6 + $0x10] sm:$0xff]
    %v2532 = vld [vmem:[%s6 + $0x18] sm:$0xff]
    %v2533 = vld [vmem:[%s6 + $0x20] sm:$0xff]
    %v2534 = vld [vmem:[%s6 + $0x28] sm:$0xff]
    %v2535 = vld [vmem:[%s6 + $0x30] sm:$0xff]
    %v2536 = vld [vmem:[%s6 + $0x38] sm:$0xff]
    %v2537 = vld [vmem:[%s6 + $0x40] sm:$0xff]
    %v2538 = vld [vmem:[%s6 + $0x48] sm:$0xff]
    %v2539 = vld [vmem:[%s6 + $0x50] sm:$0xff]
    %v2540 = vld [vmem:[%s6 + $0x58] sm:$0xff]
    %v2541 = vld [vmem:[%s6 + $0x60] sm:$0xff]
    %v2542 = vld [vmem:[%s6 + $0x68] sm:$0xff]
    %v2543 = vld [vmem:[%s6 + $0x70] sm:$0xff]
    %v2544 = vld [vmem:[%s6 + $0x78] sm:$0xff]
    %v2545 = vld [vmem:[%s6 + $0x80] sm:$0xff]
    %v2546 = vld [vmem:[%s6 + $0x88] sm:$0xff]
    %v2547 = vld [vmem:[%s6 + $0x90] sm:$0xff]
    %v2548 = vld [vmem:[%s6 + $0x98] sm:$0xff]
    %v2549 = vld [vmem:[%s6 + $0xa0] sm:$0xff]
    %v2550 = vld [vmem:[%s6 + $0xa8] sm:$0xff]
    %v2551 = vld [vmem:[%s6 + $0xb0] sm:$0xff]
    %v2552 = vld [vmem:[%s6 + $0xb8] sm:$0xff]
    %v2553 = vld [vmem:[%s6 + $0xc0] sm:$0xff]
    %v2554 = vld [vmem:[%s6 + $0xc8] sm:$0xff]
    %v2555 = vld [vmem:[%s6 + $0xd0] sm:$0xff]
    %v2556 = vld [vmem:[%s6 + $0xd8] sm:$0xff]
    %v2557 = vld [vmem:[%s6 + $0xe0] sm:$0xff]
    %v2558 = vld [vmem:[%s6 + $0xe8] sm:$0xff]
    %v2559 = vld [vmem:[%s6 + $0xf0] sm:$0xff]
    %v2560 = vld [vmem:[%s6 + $0xf8] sm:$0xff]
    %v2561 = vld [vmem:[%s6 + $0x100] sm:$0xff]
    %v2562 = vld [vmem:[%s6 + $0x108] sm:$0xff]
    %v2563 = vld [vmem:[%s7] sm:$0x1]
    %v2565 = vlaneseq
    %v2566 = vshrl.u32 %v2565, 7
    %v2567 = vsub.s32 0, %v2566
    %v2568 = vrot.slane %v2563, %v2567
    %v2571 = vsel %vm551, %v2528, 0
    %2573 = vmatprep.subr.mxu0 0.0
    %2574 = vmatpush1.msra.mxu0 %v2529
    %2575 = vmatprep.subr.mxu0 0.0
    %2576 = vmatpush1.msra.mxu0 %v2530
    %2577 = vmatprep.subr.mxu0 0.0
    %2578 = vmatpush1.msra.mxu0 %v2531
    %2579 = vmatprep.subr.mxu0 0.0
    %2580 = vmatpush1.msra.mxu0 %v2532
    %2581 = vmatprep.subr.mxu0 0.0
    %2582 = vmatpush1.msra.mxu0 %v2533
    %2583 = vmatprep.subr.mxu0 0.0
    %2584 = vmatpush1.msra.mxu0 %v2534
    %2585 = vmatprep.subr.mxu0 0.0
    %2586 = vmatpush1.msra.mxu0 %v2535
    %2587 = vmatprep.subr.mxu0 0.0
    %2588 = vmatpush1.msra.mxu0 %v2536
    %2589 = vmatprep.subr.mxu0 0.0
    %2590 = vmatpush1.msra.mxu0 %v2537
    %2591 = vmatprep.subr.mxu0 0.0
    %2592 = vmatpush1.msra.mxu0 %v2538
    %2593 = vmatprep.subr.mxu0 0.0
    %2594 = vmatpush1.msra.mxu0 %v2539
    %2595 = vmatprep.subr.mxu0 0.0
    %2596 = vmatpush1.msra.mxu0 %v2540
    %2597 = vmatprep.subr.mxu0 0.0
    %2598 = vmatpush1.msra.mxu0 %v2541
    %2599 = vmatprep.subr.mxu0 0.0
    %2600 = vmatpush1.msra.mxu0 %v2542
    %2601 = vmatprep.subr.mxu0 0.0
    %2602 = vmatpush1.msra.mxu0 %v2543
    %2603 = vmatprep.subr.mxu0 0.0
    %2604 = vmatpush1.msra.mxu0 %v2544
    %2605 = vmatprep.subr.mxu0 0.0
    %2606 = vmatpush1.msra.mxu0 %v2545
    %2607 = vmatprep.subr.mxu0 0.0
    %2608 = vmatpush1.msra.mxu0 %v2546
    %2609 = vmatprep.subr.mxu0 0.0
    %2610 = vmatpush1.msra.mxu0 %v2547
    %2611 = vmatprep.subr.mxu0 0.0
    %2612 = vmatpush1.msra.mxu0 %v2548
    %2613 = vmatprep.subr.mxu0 0.0
    %2614 = vmatpush1.msra.mxu0 %v2549
    %2615 = vmatprep.subr.mxu0 0.0
    %2616 = vmatpush1.msra.mxu0 %v2550
    %2617 = vmatprep.subr.mxu0 0.0
    %2618 = vmatpush1.msra.mxu0 %v2551
    %2619 = vmatprep.subr.mxu0 0.0
    %2620 = vmatpush1.msra.mxu0 %v2552
    %2621 = vmatprep.subr.mxu0 0.0
    %2622 = vmatpush1.msra.mxu0 %v2553
    %2623 = vmatprep.subr.mxu0 0.0
    %2624 = vmatpush1.msra.mxu0 %v2554
    %2625 = vmatprep.subr.mxu0 0.0
    %2626 = vmatpush1.msra.mxu0 %v2555
    %2627 = vmatprep.subr.mxu0 0.0
    %2628 = vmatpush1.msra.mxu0 %v2556
    %2629 = vmatprep.subr.mxu0 0.0
    %2630 = vmatpush1.msra.mxu0 %v2557
    %2631 = vmatprep.subr.mxu0 0.0
    %2632 = vmatpush1.msra.mxu0 %v2558
    %2633 = vmatprep.subr.mxu0 0.0
    %2634 = vmatpush1.msra.mxu0 %v2559
    %2635 = vmatprep.subr.mxu0 0.0
    %2636 = vmatpush1.msra.mxu0 %v2560
    %2637 = vmatprep.mubr.f32.mxu0 %v2527
    %2638 = vmatmul.mubr.f32.gmra.mrb[0].mxu0 %v2526
    %v2639 = vpop.f32.mrb[0].mxu0
    %v2640 = vadd.f32 %v2568, %v2639
    %v2641 = vpop.f32.mrb[0].mxu0
    %2642 = vdwg.mxu0
    %2643 = vmatprep.subr.mxu0 0.0
    %2644 = vmatpush1.msra.mxu0 %v2561
    %2645 = vmatprep.subr.mxu0 0.0
    %2646 = vmatpush1.msra.mxu0 %v2562
    %2647 = vmatprep.subr.mxu0 0.0
    %2648 = vmatpush1.msra.mxu0 0.0
    %2649 = vmatprep.subr.mxu0 0.0
    %2650 = vmatpush1.msra.mxu0 0.0
    %2651 = vmatprep.subr.mxu0 0.0
    %2652 = vmatpush1.msra.mxu0 0.0
    %2653 = vmatprep.subr.mxu0 0.0
    %2654 = vmatpush1.msra.mxu0 0.0
    %2655 = vmatprep.subr.mxu0 0.0
    %2656 = vmatpush1.msra.mxu0 0.0
    %2657 = vmatprep.subr.mxu0 0.0
    %2658 = vmatpush1.msra.mxu0 0.0
    %2659 = vmatprep.subr.mxu0 0.0
    %2660 = vmatpush1.msra.mxu0 0.0
    %2661 = vmatprep.subr.mxu0 0.0
    %2662 = vmatpush1.msra.mxu0 0.0
    %2663 = vmatprep.subr.mxu0 0.0
    %2664 = vmatpush1.msra.mxu0 0.0
    %2665 = vmatprep.subr.mxu0 0.0
    %2666 = vmatpush1.msra.mxu0 0.0
    %2667 = vmatprep.subr.mxu0 0.0
    %2668 = vmatpush1.msra.mxu0 0.0
    %2669 = vmatprep.subr.mxu0 0.0
    %2670 = vmatpush1.msra.mxu0 0.0
    %2671 = vmatprep.subr.mxu0 0.0
    %2672 = vmatpush1.msra.mxu0 0.0
    %2673 = vmatprep.subr.mxu0 0.0
    %2674 = vmatpush1.msra.mxu0 0.0
    %2675 = vmatprep.subr.mxu0 0.0
    %2676 = vmatpush1.msra.mxu0 0.0
    %2677 = vmatprep.subr.mxu0 0.0
    %2678 = vmatpush1.msra.mxu0 0.0
    %2679 = vmatprep.subr.mxu0 0.0
    %2680 = vmatpush1.msra.mxu0 0.0
    %2681 = vmatprep.subr.mxu0 0.0
    %2682 = vmatpush1.msra.mxu0 0.0
    %2683 = vmatprep.subr.mxu0 0.0
    %2684 = vmatpush1.msra.mxu0 0.0
    %2685 = vmatprep.subr.mxu0 0.0
    %2686 = vmatpush1.msra.mxu0 0.0
    %2687 = vmatprep.subr.mxu0 0.0
    %2688 = vmatpush1.msra.mxu0 0.0
    %2689 = vmatprep.subr.mxu0 0.0
    %2690 = vmatpush1.msra.mxu0 0.0
    %2691 = vmatprep.subr.mxu0 0.0
    %2692 = vmatpush1.msra.mxu0 0.0
    %2693 = vmatprep.subr.mxu0 0.0
    %2694 = vmatpush1.msra.mxu0 0.0
    %2695 = vmatprep.subr.mxu0 0.0
    %2696 = vmatpush1.msra.mxu0 0.0
    %2697 = vmatprep.subr.mxu0 0.0
    %2698 = vmatpush1.msra.mxu0 0.0
    %2699 = vmatprep.subr.mxu0 0.0
    %2700 = vmatpush1.msra.mxu0 0.0
    %2701 = vmatprep.subr.mxu0 0.0
    %2702 = vmatpush1.msra.mxu0 0.0
    %2703 = vmatprep.subr.mxu0 0.0
    %2704 = vmatpush1.msra.mxu0 0.0
    %2705 = vmatprep.subr.mxu0 0.0
    %2706 = vmatpush1.msra.mxu0 0.0
    %2707 = vmatprep.mubr.f32.mxu0 0.0
    %2708 = vmatmul.mubr.f32.gmra.mrb[0].mxu0 %v2571
    %v2709 = vpop.f32.mrb[0].mxu0
    %v2710 = vadd.f32 %v2640, %v2709
    %v2711 = vpop.f32.mrb[0].mxu0
    %2712 = vdwg.mxu0
    %2713 = vst [vmem:[#allocation2] sm:$0xff] %v2710
    // Predicated region
    $region34: #{tpu_custom_call.1} parent=1 // pred_check
      _
    $region35: #{tpu_custom_call.1} parent=1 // pred_check_branch
      %2715 = sbr.rel (0) target = $region37
    $region36: #{tpu_custom_call.1} parent=1 // pred_region
      %s2717 = ssub.s32 128, 128
      %2718 = vsyncadd [#allocation3], %s2717
      %s2720 = sshll.u32 [#allocation2], 4
      %s2721 = int_to_ptr.vmem [resolvable:$true] %s2720
      %2723 = dma.vmem_to_hbm [thread:$0]  %s2721, 128, %s8, [#allocation3]
    $region37: #{tpu_custom_call.1} parent=1 // pred_fallthru
      _
    // Predicated region
    $region38: #{tpu_custom_call.1} parent=1 // pred_check
      _
    $region39: #{tpu_custom_call.1} parent=1 // pred_check_branch
      %2725 = sbr.rel (0) target = $region41
    $region40: #{tpu_custom_call.1} parent=1 // pred_region
      %2726 = dma.done [#allocation3], 128
    $region41: #{tpu_custom_call.1} parent=1 // pred_fallthru
      _
    %2727 = vsyncpa [#allocation3], 1

</llo_original>
